<compile_context>
chip_gen: v7x
topology: tpu7x:2x2x1
jax: 0.10.0
libtpu: 0.0.40
codegen_flags: <defaults>
</compile_context>

<pallas_src>
import jax
import jax.numpy as jnp
from jax.experimental import pallas as pl
from jax.experimental.pallas import tpu as pltpu


def _round_up(n, m):
    return ((n + m - 1) // m) * m


def _cdiv(a, b):
    return (a + b - 1) // b


def _pad_to(a, shape, dtype):
    """Cast + zero-pad a 2-D array up to `shape`."""
    a = a.astype(dtype)
    if tuple(a.shape) == tuple(shape):
        return a
    out = jnp.zeros(shape, dtype)
    return out.at[: a.shape[0], : a.shape[1]].set(a)


def _vae_kernel(
    x_ref, eps_ref,
    w1, b1, w2, b2, w3, b3,
    wh, bh,                       # packed mu|logvar head: (64, 128)
    w5, b5, w6, b6, w7, b7, w8, b8,
    recon_ref, lat_ref,
):
    f32 = jnp.float32
    bf16 = jnp.bfloat16

    def layer(h_bf16, w_ref, b_ref, act=True):
        # bf16 operands, f32 accumulation on the MXU.
        acc = jnp.dot(h_bf16, w_ref[...], preferred_element_type=f32) + b_ref[...]
        if act:
            return jnp.tanh(acc).astype(bf16)
        return acc

    # ---- encoder (Tanh, no batch norm) ----
    h1 = layer(x_ref[...], w1, b1)          # (TB, 256)
    h2 = layer(h1, w2, b2)                  # (TB, 128)
    h3 = layer(h2, w3, b3)                  # (TB, 64)

    # ---- packed mu|logvar head: mu in lanes [0,64), logvar in lanes [64,128) ----
    head = layer(h3, wh, bh, act=False)     # (TB, 128) f32
    lat_ref[...] = head                     # single lane-dense latent output

    # ---- reparameterize: z = mu + eps * exp(0.5 * logvar) ----
    # Roll by 64 lanes (XLU) so logvar sits on the mu lanes; mask the other
    # half before exp so junk lanes can't overflow.  Padded latent lanes:
    # head = 0, eps = 0 -> z = 0; lanes >= 64 carry logvar junk but w5's
    # padded rows are zero, so nothing leaks into the decoder.
    rolled = pltpu.roll(head, shift=64, axis=1)
    lane = jax.lax.broadcasted_iota(jnp.int32, head.shape, 1)
    std = jnp.exp(0.5 * jnp.where(lane < 64, rolled, 0.0))
    z = (head + eps_ref[...] * std).astype(bf16)   # (TB, 128)

    # ---- decoder ----
    h4 = layer(z, w5, b5)                   # (TB, 64)
    h5 = layer(h4, w6, b6)                  # (TB, 128)
    h6 = layer(h5, w7, b7)                  # (TB, 256)
    recon_ref[...] = layer(h6, w8, b8, act=False)   # (TB, in_pad)


def vae_forward(x, eps, params, *, batch_tile=512):
    """x: (B, input_dim); eps: (B, latent_dim); params: dict name -> (W, b)."""
    B, input_dim = x.shape
    latent_dim = eps.shape[1]
    assert latent_dim <= 64, "packed mu|logvar head assumes latent_dim <= 64"

    in_pad = _round_up(input_dim, 128)

    # Balanced batch tiling: cap tiles at batch_tile, avoid large padding waste,
    # and use >= 2 grid steps when the batch allows (v7x has 2 TensorCores).
    steps = max(_cdiv(B, batch_tile), 2 if B >= 16 else 1)
    tb = _round_up(_cdiv(B, steps), 8)
    b_pad = _round_up(B, tb)

    # Inputs: x unpadded along features (bf16 halves its DMA); eps padded to a
    # full 128-lane slab with zeros (padded lanes must be exactly 0).
    x_p = _pad_to(x, (b_pad, input_dim), jnp.bfloat16)
    eps_p = _pad_to(eps, (b_pad, 128), jnp.float32)

    def wb(name):
        w, b = params[name]
        return w.astype(jnp.float32), b.reshape(1, -1).astype(jnp.float32)

    w1, b1 = wb("fc1")
    w2, b2 = wb("fc2")
    w3, b3 = wb("fc3")
    w41, b41 = wb("fc41")
    w42, b42 = wb("fc42")
    w5, b5 = wb("fc5")
    w6, b6 = wb("fc6")
    w7, b7 = wb("fc7")
    w8, b8 = wb("fc8")

    bf16 = jnp.bfloat16

    # Packed mu|logvar head: mu columns [0,latent), logvar columns [64,64+latent),
    # all other columns/bias lanes zero.
    wh = jnp.zeros((64, 128), jnp.float32)
    wh = wh.at[:, :latent_dim].set(w41)
    wh = wh.at[:, 64:64 + latent_dim].set(w42)
    bh = jnp.zeros((1, 128), jnp.float32)
    bh = bh.at[:, :latent_dim].set(b41)
    bh = bh.at[:, 64:64 + latent_dim].set(b42)

    # fc5 takes the full 128-lane z; only rows [0, latent) are real.
    w5_p = _pad_to(w5, (128, 64), bf16)
    # fc8 output columns padded to in_pad so the recon store is lane-dense.
    w8_p = _pad_to(w8, (256, in_pad), bf16)
    b8_p = _pad_to(b8, (1, in_pad), jnp.float32)

    operands = [
        x_p, eps_p,
        w1.astype(bf16), b1, w2.astype(bf16), b2, w3.astype(bf16), b3,
        wh.astype(bf16), bh,
        w5_p, b5, w6.astype(bf16), b6, w7.astype(bf16), b7, w8_p, b8_p,
    ]

    grid = (b_pad // tb,)

    def stream_spec(n_cols):
        # one batch tile per grid step
        return pl.BlockSpec((tb, n_cols), lambda i: (i, 0))

    def resident_spec(arr):
        # same block every step -> stays resident in VMEM, DMA'd once
        return pl.BlockSpec(arr.shape, lambda i: (0, 0))

    in_specs = [stream_spec(input_dim), stream_spec(128)]
    in_specs += [resident_spec(a) for a in operands[2:]]

    out_shapes = (
        jax.ShapeDtypeStruct((b_pad, in_pad), jnp.float32),   # recon (padded)
        jax.ShapeDtypeStruct((b_pad, 128), jnp.float32),      # packed mu|logvar
    )
    out_specs = (
        stream_spec(in_pad),
        stream_spec(128),
    )

    recon_p, lat_p = pl.pallas_call(
        _vae_kernel,
        out_shape=out_shapes,
        grid=grid,
        in_specs=in_specs,
        out_specs=out_specs,
        compiler_params=pltpu.CompilerParams(
            dimension_semantics=("parallel",)),
    )(*operands)

    # Slice padding off outside the kernel (keeps kernel stores lane-dense).
    recon = recon_p[:B, :input_dim]
    mu = lat_p[:B, :latent_dim]
    logvar = lat_p[:B, 64:64 + latent_dim]
    return recon, mu, logvar


def init_params(key, input_dim, latent_dim):
    """Deterministic parameter init (PyTorch-like uniform scale)."""
    sizes = {
        "fc1": (input_dim, 256),
        "fc2": (256, 128),
        "fc3": (128, 64),
        "fc41": (64, latent_dim),
        "fc42": (64, latent_dim),
        "fc5": (latent_dim, 64),
        "fc6": (64, 128),
        "fc7": (128, 256),
        "fc8": (256, input_dim),
    }
    params = {}
    for i, (name, (fan_in, fan_out)) in enumerate(sizes.items()):
        kw, kb = jax.random.split(jax.random.fold_in(key, i))
        bound = 1.0 / jnp.sqrt(jnp.float32(fan_in))
        w = jax.random.uniform(kw, (fan_in, fan_out), jnp.float32, -bound, bound)
        b = jax.random.uniform(kb, (fan_out,), jnp.float32, -bound, bound)
        params[name] = (w, b)
    return params


def vae_reference(x, eps, params):
    """Pure-JAX f32 reference for correctness checking."""
    def linear(h, name):
        w, b = params[name]
        return h @ w + b

    h1 = jnp.tanh(linear(x, "fc1"))
    h2 = jnp.tanh(linear(h1, "fc2"))
    h3 = jnp.tanh(linear(h2, "fc3"))
    mu = linear(h3, "fc41")
    logvar = linear(h3, "fc42")
    z = mu + eps * jnp.exp(0.5 * logvar)
    h4 = jnp.tanh(linear(z, "fc5"))
    h5 = jnp.tanh(linear(h4, "fc6"))
    h6 = jnp.tanh(linear(h5, "fc7"))
    recon = linear(h6, "fc8")
    return recon, mu, logvar


if __name__ == "__main__":
    B = 8
    INPUT_DIM = 64
    LATENT_DIM = 7

    key = jax.random.PRNGKey(0)
    k_x, k_eps, k_p = jax.random.split(key, 3)

    x = jax.random.normal(k_x, (B, INPUT_DIM), jnp.float32)
    eps = jax.random.normal(k_eps, (B, LATENT_DIM), jnp.float32)
    params = init_params(k_p, INPUT_DIM, LATENT_DIM)

    recon, mu, logvar = jax.block_until_ready(vae_forward(x, eps, params))

    # sanity check against pure-JAX f32 reference (bf16 matmul operands ->
    # loosened tolerances)
    r_ref, mu_ref, lv_ref = vae_reference(x, eps, params)
    assert jnp.allclose(recon, r_ref, atol=5e-2, rtol=5e-2)
    assert jnp.allclose(mu, mu_ref, atol=5e-2, rtol=5e-2)
    assert jnp.allclose(logvar, lv_ref, atol=5e-2, rtol=5e-2)

    print("KERNEL_OK")
</pallas_src>

<mosaic_0001>
module attributes {stable_mosaic.version = 11 : i64} {
  func.func @_vae_kernel(%arg0: i32, %arg1: memref<8x64xbf16, #tpu.memory_space<vmem>>, %arg2: memref<8x128xf32, #tpu.memory_space<vmem>>, %arg3: memref<64x256xbf16, #tpu.memory_space<vmem>>, %arg4: memref<1x256xf32, #tpu.memory_space<vmem>>, %arg5: memref<256x128xbf16, #tpu.memory_space<vmem>>, %arg6: memref<1x128xf32, #tpu.memory_space<vmem>>, %arg7: memref<128x64xbf16, #tpu.memory_space<vmem>>, %arg8: memref<1x64xf32, #tpu.memory_space<vmem>>, %arg9: memref<64x128xbf16, #tpu.memory_space<vmem>>, %arg10: memref<1x128xf32, #tpu.memory_space<vmem>>, %arg11: memref<128x64xbf16, #tpu.memory_space<vmem>>, %arg12: memref<1x64xf32, #tpu.memory_space<vmem>>, %arg13: memref<64x128xbf16, #tpu.memory_space<vmem>>, %arg14: memref<1x128xf32, #tpu.memory_space<vmem>>, %arg15: memref<128x256xbf16, #tpu.memory_space<vmem>>, %arg16: memref<1x256xf32, #tpu.memory_space<vmem>>, %arg17: memref<256x128xbf16, #tpu.memory_space<vmem>>, %arg18: memref<1x128xf32, #tpu.memory_space<vmem>>, %arg19: memref<8x128xf32, #tpu.memory_space<vmem>>, %arg20: memref<8x128xf32, #tpu.memory_space<vmem>>) attributes {dimension_semantics = [#tpu.dimension_semantics<parallel>], iteration_bounds = array<i64: 1>, scalar_prefetch = 0 : i64, scratch_operands = 0 : i64, tpu.core_type = #tpu.core_type<tc>, window_params = [{transform_indices = @transform_0, window_bounds = array<i64: 8, 64>}, {transform_indices = @transform_1, window_bounds = array<i64: 8, 128>}, {pipeline_mode = #tpu.pipeline_mode<synchronous>, transform_indices = @transform_2, window_bounds = array<i64: 64, 256>}, {pipeline_mode = #tpu.pipeline_mode<synchronous>, transform_indices = @transform_3, window_bounds = array<i64: 1, 256>}, {pipeline_mode = #tpu.pipeline_mode<synchronous>, transform_indices = @transform_4, window_bounds = array<i64: 256, 128>}, {pipeline_mode = #tpu.pipeline_mode<synchronous>, transform_indices = @transform_5, window_bounds = array<i64: 1, 128>}, {pipeline_mode = #tpu.pipeline_mode<synchronous>, transform_indices = @transform_6, window_bounds = array<i64: 128, 64>}, {pipeline_mode = #tpu.pipeline_mode<synchronous>, transform_indices = @transform_7, window_bounds = array<i64: 1, 64>}, {pipeline_mode = #tpu.pipeline_mode<synchronous>, transform_indices = @transform_8, window_bounds = array<i64: 64, 128>}, {pipeline_mode = #tpu.pipeline_mode<synchronous>, transform_indices = @transform_9, window_bounds = array<i64: 1, 128>}, {pipeline_mode = #tpu.pipeline_mode<synchronous>, transform_indices = @transform_10, window_bounds = array<i64: 128, 64>}, {pipeline_mode = #tpu.pipeline_mode<synchronous>, transform_indices = @transform_11, window_bounds = array<i64: 1, 64>}, {pipeline_mode = #tpu.pipeline_mode<synchronous>, transform_indices = @transform_12, window_bounds = array<i64: 64, 128>}, {pipeline_mode = #tpu.pipeline_mode<synchronous>, transform_indices = @transform_13, window_bounds = array<i64: 1, 128>}, {pipeline_mode = #tpu.pipeline_mode<synchronous>, transform_indices = @transform_14, window_bounds = array<i64: 128, 256>}, {pipeline_mode = #tpu.pipeline_mode<synchronous>, transform_indices = @transform_15, window_bounds = array<i64: 1, 256>}, {pipeline_mode = #tpu.pipeline_mode<synchronous>, transform_indices = @transform_16, window_bounds = array<i64: 256, 128>}, {pipeline_mode = #tpu.pipeline_mode<synchronous>, transform_indices = @transform_17, window_bounds = array<i64: 1, 128>}, {transform_indices = @transform_18, window_bounds = array<i64: 8, 128>}, {transform_indices = @transform_19, window_bounds = array<i64: 8, 128>}]} {
    %c0 = arith.constant 0 : index
    %c0_0 = arith.constant 0 : index
    %0 = vector.load %arg1[%c0, %c0_0] : memref<8x64xbf16, #tpu.memory_space<vmem>>, vector<8x64xbf16>
    %c0_1 = arith.constant 0 : index
    %c0_2 = arith.constant 0 : index
    %1 = vector.load %arg3[%c0_1, %c0_2] : memref<64x256xbf16, #tpu.memory_space<vmem>>, vector<64x256xbf16>
    %cst = arith.constant dense<0.000000e+00> : vector<8x256xf32>
    %2 = tpu.matmul %0, %1, %cst {dimension_numbers = #tpu.dot_dimension_numbers<[1], [0], [0], [1], [0, 0, 1, 1], [], []>} : vector<8x64xbf16>, vector<64x256xbf16>, vector<8x256xf32> -> vector<8x256xf32>
    %c0_3 = arith.constant 0 : index
    %c0_4 = arith.constant 0 : index
    %3 = vector.load %arg4[%c0_3, %c0_4] : memref<1x256xf32, #tpu.memory_space<vmem>>, vector<1x256xf32>
    %4 = vector.broadcast %3 : vector<1x256xf32> to vector<8x256xf32>
    %5 = arith.addf %2, %4 : vector<8x256xf32>
    %6 = math.tanh %5 : vector<8x256xf32>
    %7 = arith.truncf %6 : vector<8x256xf32> to vector<8x256xbf16>
    %c0_5 = arith.constant 0 : index
    %c0_6 = arith.constant 0 : index
    %8 = vector.load %arg5[%c0_5, %c0_6] : memref<256x128xbf16, #tpu.memory_space<vmem>>, vector<256x128xbf16>
    %cst_7 = arith.constant dense<0.000000e+00> : vector<8x128xf32>
    %9 = tpu.matmul %7, %8, %cst_7 {dimension_numbers = #tpu.dot_dimension_numbers<[1], [0], [0], [1], [0, 0, 1, 1], [], []>} : vector<8x256xbf16>, vector<256x128xbf16>, vector<8x128xf32> -> vector<8x128xf32>
    %c0_8 = arith.constant 0 : index
    %c0_9 = arith.constant 0 : index
    %10 = vector.load %arg6[%c0_8, %c0_9] : memref<1x128xf32, #tpu.memory_space<vmem>>, vector<1x128xf32>
    %11 = vector.broadcast %10 : vector<1x128xf32> to vector<8x128xf32>
    %12 = arith.addf %9, %11 : vector<8x128xf32>
    %13 = math.tanh %12 : vector<8x128xf32>
    %14 = arith.truncf %13 : vector<8x128xf32> to vector<8x128xbf16>
    %c0_10 = arith.constant 0 : index
    %c0_11 = arith.constant 0 : index
    %15 = vector.load %arg7[%c0_10, %c0_11] : memref<128x64xbf16, #tpu.memory_space<vmem>>, vector<128x64xbf16>
    %cst_12 = arith.constant dense<0.000000e+00> : vector<8x64xf32>
    %16 = tpu.matmul %14, %15, %cst_12 {dimension_numbers = #tpu.dot_dimension_numbers<[1], [0], [0], [1], [0, 0, 1, 1], [], []>} : vector<8x128xbf16>, vector<128x64xbf16>, vector<8x64xf32> -> vector<8x64xf32>
    %c0_13 = arith.constant 0 : index
    %c0_14 = arith.constant 0 : index
    %17 = vector.load %arg8[%c0_13, %c0_14] : memref<1x64xf32, #tpu.memory_space<vmem>>, vector<1x64xf32>
    %18 = vector.broadcast %17 : vector<1x64xf32> to vector<8x64xf32>
    %19 = arith.addf %16, %18 : vector<8x64xf32>
    %20 = math.tanh %19 : vector<8x64xf32>
    %21 = arith.truncf %20 : vector<8x64xf32> to vector<8x64xbf16>
    %c0_15 = arith.constant 0 : index
    %c0_16 = arith.constant 0 : index
    %22 = vector.load %arg9[%c0_15, %c0_16] : memref<64x128xbf16, #tpu.memory_space<vmem>>, vector<64x128xbf16>
    %cst_17 = arith.constant dense<0.000000e+00> : vector<8x128xf32>
    %23 = tpu.matmul %21, %22, %cst_17 {dimension_numbers = #tpu.dot_dimension_numbers<[1], [0], [0], [1], [0, 0, 1, 1], [], []>} : vector<8x64xbf16>, vector<64x128xbf16>, vector<8x128xf32> -> vector<8x128xf32>
    %c0_18 = arith.constant 0 : index
    %c0_19 = arith.constant 0 : index
    %24 = vector.load %arg10[%c0_18, %c0_19] : memref<1x128xf32, #tpu.memory_space<vmem>>, vector<1x128xf32>
    %25 = vector.broadcast %24 : vector<1x128xf32> to vector<8x128xf32>
    %26 = arith.addf %23, %25 : vector<8x128xf32>
    %c0_20 = arith.constant 0 : index
    %c0_21 = arith.constant 0 : index
    %27 = vector.load %arg20[%c0_20, %c0_21] : memref<8x128xf32, #tpu.memory_space<vmem>>, vector<8x128xf32>
    tpu.vector_store %arg20[%c0_20, %c0_21], %26 {strides = array<i32>} : memref<8x128xf32, #tpu.memory_space<vmem>>, vector<8x128xf32>,
    %c64_i32 = arith.constant 64 : i32
    %28 = tpu.dynamic_rotate %26 by %c64_i32 dim 1 : vector<8x128xf32>, i32 -> vector<8x128xf32>
    %29 = tpu.iota {dimensions = array<i32: 1>} : vector<8x128xi32>
    %c64_i32_22 = arith.constant 64 : i32
    %30 = vector.broadcast %c64_i32_22 : i32 to vector<8x128xi32>
    %31 = arith.cmpi slt, %29, %30 : vector<8x128xi32>
    %cst_23 = arith.constant 0.000000e+00 : f32
    %32 = vector.broadcast %cst_23 : f32 to vector<8x128xf32>
    %33 = arith.select %31, %28, %32 : vector<8x128xi1>, vector<8x128xf32>
    %cst_24 = arith.constant 5.000000e-01 : f32
    %34 = vector.broadcast %cst_24 : f32 to vector<8x128xf32>
    %35 = arith.mulf %34, %33 : vector<8x128xf32>
    %36 = math.exp %35 : vector<8x128xf32>
    %c0_25 = arith.constant 0 : index
    %c0_26 = arith.constant 0 : index
    %37 = vector.load %arg2[%c0_25, %c0_26] : memref<8x128xf32, #tpu.memory_space<vmem>>, vector<8x128xf32>
    %38 = arith.mulf %37, %36 : vector<8x128xf32>
    %39 = arith.addf %26, %38 : vector<8x128xf32>
    %40 = arith.truncf %39 : vector<8x128xf32> to vector<8x128xbf16>
    %c0_27 = arith.constant 0 : index
    %c0_28 = arith.constant 0 : index
    %41 = vector.load %arg11[%c0_27, %c0_28] : memref<128x64xbf16, #tpu.memory_space<vmem>>, vector<128x64xbf16>
    %cst_29 = arith.constant dense<0.000000e+00> : vector<8x64xf32>
    %42 = tpu.matmul %40, %41, %cst_29 {dimension_numbers = #tpu.dot_dimension_numbers<[1], [0], [0], [1], [0, 0, 1, 1], [], []>} : vector<8x128xbf16>, vector<128x64xbf16>, vector<8x64xf32> -> vector<8x64xf32>
    %c0_30 = arith.constant 0 : index
    %c0_31 = arith.constant 0 : index
    %43 = vector.load %arg12[%c0_30, %c0_31] : memref<1x64xf32, #tpu.memory_space<vmem>>, vector<1x64xf32>
    %44 = vector.broadcast %43 : vector<1x64xf32> to vector<8x64xf32>
    %45 = arith.addf %42, %44 : vector<8x64xf32>
    %46 = math.tanh %45 : vector<8x64xf32>
    %47 = arith.truncf %46 : vector<8x64xf32> to vector<8x64xbf16>
    %c0_32 = arith.constant 0 : index
    %c0_33 = arith.constant 0 : index
    %48 = vector.load %arg13[%c0_32, %c0_33] : memref<64x128xbf16, #tpu.memory_space<vmem>>, vector<64x128xbf16>
    %cst_34 = arith.constant dense<0.000000e+00> : vector<8x128xf32>
    %49 = tpu.matmul %47, %48, %cst_34 {dimension_numbers = #tpu.dot_dimension_numbers<[1], [0], [0], [1], [0, 0, 1, 1], [], []>} : vector<8x64xbf16>, vector<64x128xbf16>, vector<8x128xf32> -> vector<8x128xf32>
    %c0_35 = arith.constant 0 : index
    %c0_36 = arith.constant 0 : index
    %50 = vector.load %arg14[%c0_35, %c0_36] : memref<1x128xf32, #tpu.memory_space<vmem>>, vector<1x128xf32>
    %51 = vector.broadcast %50 : vector<1x128xf32> to vector<8x128xf32>
    %52 = arith.addf %49, %51 : vector<8x128xf32>
    %53 = math.tanh %52 : vector<8x128xf32>
    %54 = arith.truncf %53 : vector<8x128xf32> to vector<8x128xbf16>
    %c0_37 = arith.constant 0 : index
    %c0_38 = arith.constant 0 : index
    %55 = vector.load %arg15[%c0_37, %c0_38] : memref<128x256xbf16, #tpu.memory_space<vmem>>, vector<128x256xbf16>
    %cst_39 = arith.constant dense<0.000000e+00> : vector<8x256xf32>
    %56 = tpu.matmul %54, %55, %cst_39 {dimension_numbers = #tpu.dot_dimension_numbers<[1], [0], [0], [1], [0, 0, 1, 1], [], []>} : vector<8x128xbf16>, vector<128x256xbf16>, vector<8x256xf32> -> vector<8x256xf32>
    %c0_40 = arith.constant 0 : index
    %c0_41 = arith.constant 0 : index
    %57 = vector.load %arg16[%c0_40, %c0_41] : memref<1x256xf32, #tpu.memory_space<vmem>>, vector<1x256xf32>
    %58 = vector.broadcast %57 : vector<1x256xf32> to vector<8x256xf32>
    %59 = arith.addf %56, %58 : vector<8x256xf32>
    %60 = math.tanh %59 : vector<8x256xf32>
    %61 = arith.truncf %60 : vector<8x256xf32> to vector<8x256xbf16>
    %c0_42 = arith.constant 0 : index
    %c0_43 = arith.constant 0 : index
    %62 = vector.load %arg17[%c0_42, %c0_43] : memref<256x128xbf16, #tpu.memory_space<vmem>>, vector<256x128xbf16>
    %cst_44 = arith.constant dense<0.000000e+00> : vector<8x128xf32>
    %63 = tpu.matmul %61, %62, %cst_44 {dimension_numbers = #tpu.dot_dimension_numbers<[1], [0], [0], [1], [0, 0, 1, 1], [], []>} : vector<8x256xbf16>, vector<256x128xbf16>, vector<8x128xf32> -> vector<8x128xf32>
    %c0_45 = arith.constant 0 : index
    %c0_46 = arith.constant 0 : index
    %64 = vector.load %arg18[%c0_45, %c0_46] : memref<1x128xf32, #tpu.memory_space<vmem>>, vector<1x128xf32>
    %65 = vector.broadcast %64 : vector<1x128xf32> to vector<8x128xf32>
    %66 = arith.addf %63, %65 : vector<8x128xf32>
    %c0_47 = arith.constant 0 : index
    %c0_48 = arith.constant 0 : index
    %67 = vector.load %arg19[%c0_47, %c0_48] : memref<8x128xf32, #tpu.memory_space<vmem>>, vector<8x128xf32>
    tpu.vector_store %arg19[%c0_47, %c0_48], %66 {strides = array<i32>} : memref<8x128xf32, #tpu.memory_space<vmem>>, vector<8x128xf32>,
    return
  }
  func.func @transform_0(%arg0: i32) -> (i32, i32) {
    %c0_i32 = arith.constant 0 : i32
    %c0_i32_0 = arith.constant 0 : i32
    return %arg0, %c0_i32 : i32, i32
  }
  func.func @transform_1(%arg0: i32) -> (i32, i32) {
    %c0_i32 = arith.constant 0 : i32
    %c0_i32_0 = arith.constant 0 : i32
    return %arg0, %c0_i32 : i32, i32
  }
  func.func @transform_2(%arg0: i32) -> (i32, i32) {
    %c0_i32 = arith.constant 0 : i32
    %c0_i32_0 = arith.constant 0 : i32
    %c0_i32_1 = arith.constant 0 : i32
    return %c0_i32, %c0_i32_0 : i32, i32
  }
  func.func @transform_3(%arg0: i32) -> (i32, i32) {
    %c0_i32 = arith.constant 0 : i32
    %c0_i32_0 = arith.constant 0 : i32
    %c0_i32_1 = arith.constant 0 : i32
    return %c0_i32, %c0_i32_0 : i32, i32
  }
  func.func @transform_4(%arg0: i32) -> (i32, i32) {
    %c0_i32 = arith.constant 0 : i32
    %c0_i32_0 = arith.constant 0 : i32
    %c0_i32_1 = arith.constant 0 : i32
    return %c0_i32, %c0_i32_0 : i32, i32
  }
  func.func @transform_5(%arg0: i32) -> (i32, i32) {
    %c0_i32 = arith.constant 0 : i32
    %c0_i32_0 = arith.constant 0 : i32
    %c0_i32_1 = arith.constant 0 : i32
    return %c0_i32, %c0_i32_0 : i32, i32
  }
  func.func @transform_6(%arg0: i32) -> (i32, i32) {
    %c0_i32 = arith.constant 0 : i32
    %c0_i32_0 = arith.constant 0 : i32
    %c0_i32_1 = arith.constant 0 : i32
    return %c0_i32, %c0_i32_0 : i32, i32
  }
  func.func @transform_7(%arg0: i32) -> (i32, i32) {
    %c0_i32 = arith.constant 0 : i32
    %c0_i32_0 = arith.constant 0 : i32
    %c0_i32_1 = arith.constant 0 : i32
    return %c0_i32, %c0_i32_0 : i32, i32
  }
  func.func @transform_8(%arg0: i32) -> (i32, i32) {
    %c0_i32 = arith.constant 0 : i32
    %c0_i32_0 = arith.constant 0 : i32
    %c0_i32_1 = arith.constant 0 : i32
    return %c0_i32, %c0_i32_0 : i32, i32
  }
  func.func @transform_9(%arg0: i32) -> (i32, i32) {
    %c0_i32 = arith.constant 0 : i32
    %c0_i32_0 = arith.constant 0 : i32
    %c0_i32_1 = arith.constant 0 : i32
    return %c0_i32, %c0_i32_0 : i32, i32
  }
  func.func @transform_10(%arg0: i32) -> (i32, i32) {
    %c0_i32 = arith.constant 0 : i32
    %c0_i32_0 = arith.constant 0 : i32
    %c0_i32_1 = arith.constant 0 : i32
    return %c0_i32, %c0_i32_0 : i32, i32
  }
  func.func @transform_11(%arg0: i32) -> (i32, i32) {
    %c0_i32 = arith.constant 0 : i32
    %c0_i32_0 = arith.constant 0 : i32
    %c0_i32_1 = arith.constant 0 : i32
    return %c0_i32, %c0_i32_0 : i32, i32
  }
  func.func @transform_12(%arg0: i32) -> (i32, i32) {
    %c0_i32 = arith.constant 0 : i32
    %c0_i32_0 = arith.constant 0 : i32
    %c0_i32_1 = arith.constant 0 : i32
    return %c0_i32, %c0_i32_0 : i32, i32
  }
  func.func @transform_13(%arg0: i32) -> (i32, i32) {
    %c0_i32 = arith.constant 0 : i32
    %c0_i32_0 = arith.constant 0 : i32
    %c0_i32_1 = arith.constant 0 : i32
    return %c0_i32, %c0_i32_0 : i32, i32
  }
  func.func @transform_14(%arg0: i32) -> (i32, i32) {
    %c0_i32 = arith.constant 0 : i32
    %c0_i32_0 = arith.constant 0 : i32
    %c0_i32_1 = arith.constant 0 : i32
    return %c0_i32, %c0_i32_0 : i32, i32
  }
  func.func @transform_15(%arg0: i32) -> (i32, i32) {
    %c0_i32 = arith.constant 0 : i32
    %c0_i32_0 = arith.constant 0 : i32
    %c0_i32_1 = arith.constant 0 : i32
    return %c0_i32, %c0_i32_0 : i32, i32
  }
  func.func @transform_16(%arg0: i32) -> (i32, i32) {
    %c0_i32 = arith.constant 0 : i32
    %c0_i32_0 = arith.constant 0 : i32
    %c0_i32_1 = arith.constant 0 : i32
    return %c0_i32, %c0_i32_0 : i32, i32
  }
  func.func @transform_17(%arg0: i32) -> (i32, i32) {
    %c0_i32 = arith.constant 0 : i32
    %c0_i32_0 = arith.constant 0 : i32
    %c0_i32_1 = arith.constant 0 : i32
    return %c0_i32, %c0_i32_0 : i32, i32
  }
  func.func @transform_18(%arg0: i32) -> (i32, i32) {
    %c0_i32 = arith.constant 0 : i32
    %c0_i32_0 = arith.constant 0 : i32
    return %arg0, %c0_i32 : i32, i32
  }
  func.func @transform_19(%arg0: i32) -> (i32, i32) {
    %c0_i32 = arith.constant 0 : i32
    %c0_i32_0 = arith.constant 0 : i32
    return %arg0, %c0_i32 : i32, i32
  }
}

</mosaic_0001>

<llo_original>
// kernel: tpu_custom_call.1
$region0: #{tpu_custom_call.1}
  #allocation0 [shape = 'u32[]', space=smem, size = 0x4, offset = 0x4, fixed_abs, tag = 'smem constant byte address 0x4 - core index']
  #allocation1 [shape = 'u32[144,128]{1,0:T(1,128)}', space=vmem, size = 0x12000, scoped, tag = 'internal scratch']
  %s0 = inlined_call_operand.hbm [shape: bf16[8,64], index: 0, kind: input, shape index: {}]
  %s1 = inlined_call_operand.hbm [shape: f32[8,128], index: 1, kind: input, shape index: {}]
  %s2 = inlined_call_operand.vmem [shape: bf16[64,256], index: 2, kind: input, shape index: {}]
  %s3 = inlined_call_operand.vmem [shape: f32[1,256], index: 3, kind: input, shape index: {}]
  %s4 = inlined_call_operand.vmem [shape: bf16[256,128], index: 4, kind: input, shape index: {}]
  %s5 = inlined_call_operand.hbm [shape: f32[1,128], index: 5, kind: input, shape index: {}]
  %s6 = inlined_call_operand.vmem [shape: bf16[128,64], index: 6, kind: input, shape index: {}]
  %s7 = inlined_call_operand.hbm [shape: f32[1,64], index: 7, kind: input, shape index: {}]
  %s8 = inlined_call_operand.hbm [shape: bf16[64,128], index: 8, kind: input, shape index: {}]
  %s9 = inlined_call_operand.hbm [shape: f32[1,128], index: 9, kind: input, shape index: {}]
  %s10 = inlined_call_operand.vmem [shape: bf16[128,64], index: 10, kind: input, shape index: {}]
  %s11 = inlined_call_operand.vmem [shape: f32[1,64], index: 11, kind: input, shape index: {}]
  %s12 = inlined_call_operand.hbm [shape: bf16[64,128], index: 12, kind: input, shape index: {}]
  %s13 = inlined_call_operand.vmem [shape: f32[1,128], index: 13, kind: input, shape index: {}]
  %s14 = inlined_call_operand.hbm [shape: bf16[128,256], index: 14, kind: input, shape index: {}]
  %s15 = inlined_call_operand.vmem [shape: f32[1,256], index: 15, kind: input, shape index: {}]
  %s16 = inlined_call_operand.hbm [shape: bf16[256,128], index: 16, kind: input, shape index: {}]
  %s17 = inlined_call_operand.vmem [shape: f32[1,128], index: 17, kind: input, shape index: {}]
  %s18 = inlined_call_operand.hbm [shape: f32[8,128], index: 18, kind: output, shape index: {0}]
  %s19 = inlined_call_operand.hbm [shape: f32[8,128], index: 19, kind: output, shape index: {1}]
  %20 = xla_tuple %s18, %s19
  %s21 = sld [smem:[#allocation0]]
  $region126: #{tpu_custom_call.1} parent=0
    _
  %s23 = ssub.s32 1, %s21
  %s24 = scalar_select 0, %s23, %s21
  $region1: #{tpu_custom_call.1} parent=0
    #allocation2 [shape = 'u8[2048]{0}', space=vmem, size = 0x800, scoped, tag = 'input window, operand 0, single buffered']
    #allocation3 [shape = 's32[1]{0}', space=sflag, size = 0x4, scoped, tag = 'scoped memory for tpu_custom_call.1']
    #allocation4 [shape = 's32[1]{0}', space=sflag, size = 0x4, scoped, tag = 'scoped memory for tpu_custom_call.1']
    #allocation5 [shape = 'u8[4096]{0}', space=vmem, size = 0x1000, scoped, tag = 'input window, operand 1, single buffered']
    #allocation6 [shape = 's32[1]{0}', space=sflag, size = 0x4, scoped, tag = 'scoped memory for tpu_custom_call.1']
    #allocation7 [shape = 'u8[512]{0}', space=vmem, size = 0x400, scoped, tag = 'input window, operand 5, single buffered']
    #allocation8 [shape = 'u8[512]{0}', space=vmem, size = 0x400, scoped, tag = 'input window, operand 7, single buffered']
    #allocation9 [shape = 's32[1]{0}', space=sflag, size = 0x4, scoped, tag = 'scoped memory for tpu_custom_call.1']
    #allocation10 [shape = 'u8[16384]{0}', space=vmem, size = 0x4000, scoped, tag = 'input window, operand 8, single buffered']
    #allocation11 [shape = 'u8[512]{0}', space=vmem, size = 0x400, scoped, tag = 'input window, operand 9, single buffered']
    #allocation12 [shape = 's32[1]{0}', space=sflag, size = 0x4, scoped, tag = 'scoped memory for tpu_custom_call.1']
    #allocation13 [shape = 'u8[16384]{0}', space=vmem, size = 0x4000, scoped, tag = 'input window, operand 12, single buffered']
    #allocation14 [shape = 'u8[65536]{0}', space=vmem, size = 0x10000, scoped, tag = 'input window, operand 14, single buffered']
    #allocation15 [shape = 's32[1]{0}', space=sflag, size = 0x4, scoped, tag = 'scoped memory for tpu_custom_call.1']
    #allocation16 [shape = 'u8[65536]{0}', space=vmem, size = 0x10000, scoped, tag = 'input window, operand 16, single buffered']
    #allocation17 [shape = 'u8[4096]{0}', space=vmem, size = 0x1000, scoped, tag = 'output window, operand 0, single buffered']
    #allocation18 [shape = 'u8[4096]{0}', space=vmem, size = 0x1000, scoped, tag = 'output window, operand 1, single buffered']
    #allocation19 [shape = 's32[1]{0}', space=sflag, size = 0x4, scoped, tag = 'scoped memory for tpu_custom_call.1']
    %25 = vsyncpa [#allocation3], 0
    %26 = vsyncpa [#allocation6], 0
    %27 = vsyncpa [#allocation9], 0
    %28 = vsyncpa [#allocation12], 0
    %29 = vsyncpa [#allocation15], 0
    %30 = vsyncpa [#allocation4], 0
    %31 = vsyncpa [#allocation19], 0
    // Predicated region
    $region2: #{tpu_custom_call.1} parent=1 // pred_check
      _
    $region3: #{tpu_custom_call.1} parent=1 // pred_check_branch
      %33 = sbr.rel (0) target = $region5
    $region4: #{tpu_custom_call.1} parent=1 // pred_region
      %s35 = ssub.s32 64, 64
      %36 = vsyncadd [#allocation3], %s35
      %s38 = sshll.u32 [#allocation2], 4
      %s39 = int_to_ptr.vmem [resolvable:$true] %s38
      %41 = dma.hbm_to_vmem [thread:$0]  %s0, 64, %s39, [#allocation3]
    $region5: #{tpu_custom_call.1} parent=1 // pred_fallthru
      _
    // Predicated region
    $region6: #{tpu_custom_call.1} parent=1 // pred_check
      _
    $region7: #{tpu_custom_call.1} parent=1 // pred_check_branch
      %43 = sbr.rel (0) target = $region9
    $region8: #{tpu_custom_call.1} parent=1 // pred_region
      %s45 = ssub.s32 128, 128
      %46 = vsyncadd [#allocation6], %s45
      %s48 = sshll.u32 [#allocation5], 4
      %s49 = int_to_ptr.vmem [resolvable:$true] %s48
      %51 = dma.hbm_to_vmem [thread:$0]  %s1, 128, %s49, [#allocation6]
    $region9: #{tpu_custom_call.1} parent=1 // pred_fallthru
      _
    // Predicated region
    $region10: #{tpu_custom_call.1} parent=1 // pred_check
      _
    $region11: #{tpu_custom_call.1} parent=1 // pred_check_branch
      %53 = sbr.rel (0) target = $region13
    $region12: #{tpu_custom_call.1} parent=1 // pred_region
      _
    $region13: #{tpu_custom_call.1} parent=1 // pred_fallthru
      _
    // Predicated region
    $region14: #{tpu_custom_call.1} parent=1 // pred_check
      _
    $region15: #{tpu_custom_call.1} parent=1 // pred_check_branch
      %55 = sbr.rel (0) target = $region17
    $region16: #{tpu_custom_call.1} parent=1 // pred_region
      _
    $region17: #{tpu_custom_call.1} parent=1 // pred_fallthru
      _
    // Predicated region
    $region18: #{tpu_custom_call.1} parent=1 // pred_check
      _
    $region19: #{tpu_custom_call.1} parent=1 // pred_check_branch
      %57 = sbr.rel (0) target = $region21
    $region20: #{tpu_custom_call.1} parent=1 // pred_region
      _
    $region21: #{tpu_custom_call.1} parent=1 // pred_fallthru
      _
    // Predicated region
    $region22: #{tpu_custom_call.1} parent=1 // pred_check
      _
    $region23: #{tpu_custom_call.1} parent=1 // pred_check_branch
      %59 = sbr.rel (0) target = $region25
    $region24: #{tpu_custom_call.1} parent=1 // pred_region
      %s61 = ssub.s32 16, 16
      %62 = vsyncadd [#allocation6], %s61
      %s64 = sshll.u32 [#allocation7], 4
      %s65 = int_to_ptr.vmem [resolvable:$true] %s64
      %67 = dma.hbm_to_vmem [thread:$0]  %s5, 16, %s65, [#allocation6]
    $region25: #{tpu_custom_call.1} parent=1 // pred_fallthru
      _
    // Predicated region
    $region26: #{tpu_custom_call.1} parent=1 // pred_check
      _
    $region27: #{tpu_custom_call.1} parent=1 // pred_check_branch
      %69 = sbr.rel (0) target = $region29
    $region28: #{tpu_custom_call.1} parent=1 // pred_region
      _
    $region29: #{tpu_custom_call.1} parent=1 // pred_fallthru
      _
    // Predicated region
    $region30: #{tpu_custom_call.1} parent=1 // pred_check
      _
    $region31: #{tpu_custom_call.1} parent=1 // pred_check_branch
      %71 = sbr.rel (0) target = $region33
    $region32: #{tpu_custom_call.1} parent=1 // pred_region
      %s73 = ssub.s32 16, 16
      %74 = vsyncadd [#allocation9], %s73
      %s76 = sshll.u32 [#allocation8], 4
      %s77 = int_to_ptr.vmem [resolvable:$true] %s76
      %79 = dma.hbm_to_vmem [thread:$0]  %s7, 16, %s77, [#allocation9]
    $region33: #{tpu_custom_call.1} parent=1 // pred_fallthru
      _
    // Predicated region
    $region34: #{tpu_custom_call.1} parent=1 // pred_check
      _
    $region35: #{tpu_custom_call.1} parent=1 // pred_check_branch
      %81 = sbr.rel (0) target = $region37
    $region36: #{tpu_custom_call.1} parent=1 // pred_region
      %s83 = ssub.s32 512, 512
      %84 = vsyncadd [#allocation9], %s83
      %s85 = sshll.u32 [#allocation10], 4
      %s86 = int_to_ptr.vmem [resolvable:$true] %s85
      %91 = dma.hbm_to_vmem [thread:$0]  %s8, 512, %s86, [#allocation9], 64, 64, 4
    $region37: #{tpu_custom_call.1} parent=1 // pred_fallthru
      _
    // Predicated region
    $region38: #{tpu_custom_call.1} parent=1 // pred_check
      _
    $region39: #{tpu_custom_call.1} parent=1 // pred_check_branch
      %93 = sbr.rel (0) target = $region41
    $region40: #{tpu_custom_call.1} parent=1 // pred_region
      %s95 = ssub.s32 16, 16
      %96 = vsyncadd [#allocation12], %s95
      %s98 = sshll.u32 [#allocation11], 4
      %s99 = int_to_ptr.vmem [resolvable:$true] %s98
      %101 = dma.hbm_to_vmem [thread:$0]  %s9, 16, %s99, [#allocation12]
    $region41: #{tpu_custom_call.1} parent=1 // pred_fallthru
      _
    // Predicated region
    $region42: #{tpu_custom_call.1} parent=1 // pred_check
      _
    $region43: #{tpu_custom_call.1} parent=1 // pred_check_branch
      %103 = sbr.rel (0) target = $region45
    $region44: #{tpu_custom_call.1} parent=1 // pred_region
      _
    $region45: #{tpu_custom_call.1} parent=1 // pred_fallthru
      _
    // Predicated region
    $region46: #{tpu_custom_call.1} parent=1 // pred_check
      _
    $region47: #{tpu_custom_call.1} parent=1 // pred_check_branch
      %105 = sbr.rel (0) target = $region49
    $region48: #{tpu_custom_call.1} parent=1 // pred_region
      _
    $region49: #{tpu_custom_call.1} parent=1 // pred_fallthru
      _
    // Predicated region
    $region50: #{tpu_custom_call.1} parent=1 // pred_check
      _
    $region51: #{tpu_custom_call.1} parent=1 // pred_check_branch
      %107 = sbr.rel (0) target = $region53
    $region52: #{tpu_custom_call.1} parent=1 // pred_region
      %s109 = ssub.s32 512, 512
      %110 = vsyncadd [#allocation12], %s109
      %s111 = sshll.u32 [#allocation13], 4
      %s112 = int_to_ptr.vmem [resolvable:$true] %s111
      %117 = dma.hbm_to_vmem [thread:$0]  %s12, 512, %s112, [#allocation12], 64, 64, 4
    $region53: #{tpu_custom_call.1} parent=1 // pred_fallthru
      _
    // Predicated region
    $region54: #{tpu_custom_call.1} parent=1 // pred_check
      _
    $region55: #{tpu_custom_call.1} parent=1 // pred_check_branch
      %119 = sbr.rel (0) target = $region57
    $region56: #{tpu_custom_call.1} parent=1 // pred_region
      _
    $region57: #{tpu_custom_call.1} parent=1 // pred_fallthru
      _
    // Predicated region
    $region58: #{tpu_custom_call.1} parent=1 // pred_check
      _
    $region59: #{tpu_custom_call.1} parent=1 // pred_check_branch
      %121 = sbr.rel (0) target = $region61
    $region60: #{tpu_custom_call.1} parent=1 // pred_region
      %s123 = ssub.s32 2048, 2048
      %124 = vsyncadd [#allocation15], %s123
      %s125 = sshll.u32 [#allocation14], 4
      %s126 = int_to_ptr.vmem [resolvable:$true] %s125
      %131 = dma.hbm_to_vmem [thread:$0]  %s14, 2048, %s126, [#allocation15], 128, 128, 8
    $region61: #{tpu_custom_call.1} parent=1 // pred_fallthru
      _
    // Predicated region
    $region62: #{tpu_custom_call.1} parent=1 // pred_check
      _
    $region63: #{tpu_custom_call.1} parent=1 // pred_check_branch
      %133 = sbr.rel (0) target = $region65
    $region64: #{tpu_custom_call.1} parent=1 // pred_region
      _
    $region65: #{tpu_custom_call.1} parent=1 // pred_fallthru
      _
    // Predicated region
    $region66: #{tpu_custom_call.1} parent=1 // pred_check
      _
    $region67: #{tpu_custom_call.1} parent=1 // pred_check_branch
      %135 = sbr.rel (0) target = $region69
    $region68: #{tpu_custom_call.1} parent=1 // pred_region
      %s137 = ssub.s32 2048, 2048
      %138 = vsyncadd [#allocation15], %s137
      %s139 = sshll.u32 [#allocation16], 4
      %s140 = int_to_ptr.vmem [resolvable:$true] %s139
      %145 = dma.hbm_to_vmem [thread:$0]  %s16, 2048, %s140, [#allocation15], 64, 64, 4
    $region69: #{tpu_custom_call.1} parent=1 // pred_fallthru
      _
    // Predicated region
    $region70: #{tpu_custom_call.1} parent=1 // pred_check
      _
    $region71: #{tpu_custom_call.1} parent=1 // pred_check_branch
      %147 = sbr.rel (0) target = $region73
    $region72: #{tpu_custom_call.1} parent=1 // pred_region
      _
    $region73: #{tpu_custom_call.1} parent=1 // pred_fallthru
      _
    // Predicated region
    $region74: #{tpu_custom_call.1} parent=1 // pred_check
      _
    $region75: #{tpu_custom_call.1} parent=1 // pred_check_branch
      %149 = sbr.rel (0) target = $region77
    $region76: #{tpu_custom_call.1} parent=1 // pred_region
      %150 = dma.done [#allocation3], 64
    $region77: #{tpu_custom_call.1} parent=1 // pred_fallthru
      _
    // Predicated region
    $region78: #{tpu_custom_call.1} parent=1 // pred_check
      _
    $region79: #{tpu_custom_call.1} parent=1 // pred_check_branch
      %152 = sbr.rel (0) target = $region81
    $region80: #{tpu_custom_call.1} parent=1 // pred_region
      %153 = dma.done [#allocation6], 128
    $region81: #{tpu_custom_call.1} parent=1 // pred_fallthru
      _
    // Predicated region
    $region82: #{tpu_custom_call.1} parent=1 // pred_check
      _
    $region83: #{tpu_custom_call.1} parent=1 // pred_check_branch
      %155 = sbr.rel (0) target = $region85
    $region84: #{tpu_custom_call.1} parent=1 // pred_region
      %156 = dma.done [#allocation6], 16
    $region85: #{tpu_custom_call.1} parent=1 // pred_fallthru
      _
    // Predicated region
    $region86: #{tpu_custom_call.1} parent=1 // pred_check
      _
    $region87: #{tpu_custom_call.1} parent=1 // pred_check_branch
      %158 = sbr.rel (0) target = $region89
    $region88: #{tpu_custom_call.1} parent=1 // pred_region
      %159 = dma.done [#allocation9], 16
    $region89: #{tpu_custom_call.1} parent=1 // pred_fallthru
      _
    // Predicated region
    $region90: #{tpu_custom_call.1} parent=1 // pred_check
      _
    $region91: #{tpu_custom_call.1} parent=1 // pred_check_branch
      %161 = sbr.rel (0) target = $region93
    $region92: #{tpu_custom_call.1} parent=1 // pred_region
      %162 = dma.done [#allocation9], 512
    $region93: #{tpu_custom_call.1} parent=1 // pred_fallthru
      _
    // Predicated region
    $region94: #{tpu_custom_call.1} parent=1 // pred_check
      _
    $region95: #{tpu_custom_call.1} parent=1 // pred_check_branch
      %164 = sbr.rel (0) target = $region97
    $region96: #{tpu_custom_call.1} parent=1 // pred_region
      %165 = dma.done [#allocation12], 16
    $region97: #{tpu_custom_call.1} parent=1 // pred_fallthru
      _
    // Predicated region
    $region98: #{tpu_custom_call.1} parent=1 // pred_check
      _
    $region99: #{tpu_custom_call.1} parent=1 // pred_check_branch
      %167 = sbr.rel (0) target = $region101
    $region100: #{tpu_custom_call.1} parent=1 // pred_region
      %168 = dma.done [#allocation12], 512
    $region101: #{tpu_custom_call.1} parent=1 // pred_fallthru
      _
    // Predicated region
    $region102: #{tpu_custom_call.1} parent=1 // pred_check
      _
    $region103: #{tpu_custom_call.1} parent=1 // pred_check_branch
      %170 = sbr.rel (0) target = $region105
    $region104: #{tpu_custom_call.1} parent=1 // pred_region
      %171 = dma.done [#allocation15], 2048
    $region105: #{tpu_custom_call.1} parent=1 // pred_fallthru
      _
    // Predicated region
    $region106: #{tpu_custom_call.1} parent=1 // pred_check
      _
    $region107: #{tpu_custom_call.1} parent=1 // pred_check_branch
      %173 = sbr.rel (0) target = $region109
    $region108: #{tpu_custom_call.1} parent=1 // pred_region
      %174 = dma.done [#allocation15], 2048
    $region109: #{tpu_custom_call.1} parent=1 // pred_fallthru
      _
    %v176 = vld [vmem:[#allocation2] sm:$0xf]
    %v177 = vld [vmem:[%s2] sm:$0xff]
    %v178 = vld [vmem:[%s2 + $0x8] sm:$0xff]
    %v179 = vld [vmem:[%s2 + $0x10] sm:$0xff]
    %v180 = vld [vmem:[%s2 + $0x18] sm:$0xff]
    %v181 = vld [vmem:[%s2 + $0x20] sm:$0xff]
    %v182 = vld [vmem:[%s2 + $0x28] sm:$0xff]
    %v183 = vld [vmem:[%s2 + $0x30] sm:$0xff]
    %v184 = vld [vmem:[%s2 + $0x38] sm:$0xff]
    %v185 = vld [vmem:[%s3] sm:$0x3]
    %v187 = vlaneseq
    %v188 = vshrl.u32 %v187, 7
    %v189 = vsub.s32 0, %v188
    %v190 = vrot.slane %v185, %v189
    %v191 = vlaneseq
    %v192 = vshrl.u32 %v191, 7
    %v193 = vsub.s32 1, %v192
    %v194 = vrot.slane %v185, %v193
    %v205 = vunpack.c.l.b16 %v177
    %v206 = vunpack.c.h.b16 %v177
    %v207 = vunpack.c.l.b16 %v178
    %v208 = vunpack.c.h.b16 %v178
    %v209 = vunpack.c.l.b16 %v179
    %v210 = vunpack.c.h.b16 %v179
    %v211 = vunpack.c.l.b16 %v180
    %v212 = vunpack.c.h.b16 %v180
    %v213 = vunpack.c.l.b16 %v181
    %v214 = vunpack.c.h.b16 %v181
    %v215 = vunpack.c.l.b16 %v182
    %v216 = vunpack.c.h.b16 %v182
    %v217 = vunpack.c.l.b16 %v183
    %v218 = vunpack.c.h.b16 %v183
    %v219 = vunpack.c.l.b16 %v184
    %v220 = vunpack.c.h.b16 %v184
    %v221 = vpack.c.b16 %v207, %v205
    %v222 = vpack.c.b16 %v208, %v206
    %v223 = vpack.c.b16 %v211, %v209
    %v224 = vpack.c.b16 %v212, %v210
    %v225 = vpack.c.b16 %v215, %v213
    %v226 = vpack.c.b16 %v216, %v214
    %v227 = vpack.c.b16 %v219, %v217
    %v228 = vpack.c.b16 %v220, %v218
    %vm237 = vcmask 523264
    %v239 = vsel %vm237, %v176, 0
    %241 = vmatprep.subr.bf16.mxu0 %v222
    %242 = vmatpush1.bf16.msra.mxu0 %v221
    %243 = vmatprep.subr.bf16.mxu0 %v224
    %244 = vmatpush1.bf16.msra.mxu0 %v223
    %245 = vmatprep.subr.bf16.mxu0 %v226
    %246 = vmatpush1.bf16.msra.mxu0 %v225
    %247 = vmatprep.subr.bf16.mxu0 %v228
    %248 = vmatpush1.bf16.msra.mxu0 %v227
    %249 = vmatprep.subr.bf16.mxu0 0
    %250 = vmatpush1.bf16.msra.mxu0 0
    %251 = vmatprep.subr.bf16.mxu0 0
    %252 = vmatpush1.bf16.msra.mxu0 0
    %253 = vmatprep.subr.bf16.mxu0 0
    %254 = vmatpush1.bf16.msra.mxu0 0
    %255 = vmatprep.subr.bf16.mxu0 0
    %256 = vmatpush1.bf16.msra.mxu0 0
    %257 = vmatprep.subr.bf16.mxu0 0
    %258 = vmatpush1.bf16.msra.mxu0 0
    %259 = vmatprep.subr.bf16.mxu0 0
    %260 = vmatpush1.bf16.msra.mxu0 0
    %261 = vmatprep.subr.bf16.mxu0 0
    %262 = vmatpush1.bf16.msra.mxu0 0
    %263 = vmatprep.subr.bf16.mxu0 0
    %264 = vmatpush1.bf16.msra.mxu0 0
    %265 = vmatprep.subr.bf16.mxu0 0
    %266 = vmatpush1.bf16.msra.mxu0 0
    %267 = vmatprep.subr.bf16.mxu0 0
    %268 = vmatpush1.bf16.msra.mxu0 0
    %269 = vmatprep.subr.bf16.mxu0 0
    %270 = vmatpush1.bf16.msra.mxu0 0
    %271 = vmatprep.subr.bf16.mxu0 0
    %272 = vmatpush1.bf16.msra.mxu0 0
    %273 = vmatprep.mubr.bf16.mxu0 0
    %274 = vmatmul.mubr.bf16.gmra.mrb[0].mxu0 %v239
    %v275 = vpop.f32.mrb[0].mxu0
    %v276 = vadd.f32 %v190, %v275
    %v277 = vpop.f32.mrb[0].mxu0
    %v278 = vadd.f32 %v194, %v277
    %v279 = vpop.f32.mrb[0].mxu0
    %v280 = vpop.f32.mrb[0].mxu0
    %281 = vdwg.mxu0
    %v282 = vtanh.pop %v276
    %v283 = vtanh.pop %v278
    %v284 = vpack.c.bf16 %v282, %v282
    %v285 = vpack.c.bf16 %v283, %v283
    %v286 = vld [vmem:[%s4] sm:$0xf]
    %v287 = vld [vmem:[%s4 + $0x4] sm:$0xf]
    %v288 = vld [vmem:[%s4 + $0x8] sm:$0xf]
    %v289 = vld [vmem:[%s4 + $0xc] sm:$0xf]
    %v290 = vld [vmem:[%s4 + $0x10] sm:$0xf]
    %v291 = vld [vmem:[%s4 + $0x14] sm:$0xf]
    %v292 = vld [vmem:[%s4 + $0x18] sm:$0xf]
    %v293 = vld [vmem:[%s4 + $0x1c] sm:$0xf]
    %v294 = vld [vmem:[%s4 + $0x20] sm:$0xf]
    %v295 = vld [vmem:[%s4 + $0x24] sm:$0xf]
    %v296 = vld [vmem:[%s4 + $0x28] sm:$0xf]
    %v297 = vld [vmem:[%s4 + $0x2c] sm:$0xf]
    %v298 = vld [vmem:[%s4 + $0x30] sm:$0xf]
    %v299 = vld [vmem:[%s4 + $0x34] sm:$0xf]
    %v300 = vld [vmem:[%s4 + $0x38] sm:$0xf]
    %v301 = vld [vmem:[%s4 + $0x3c] sm:$0xf]
    %v302 = vld [vmem:[%s4 + $0x40] sm:$0xf]
    %v303 = vld [vmem:[%s4 + $0x44] sm:$0xf]
    %v304 = vld [vmem:[%s4 + $0x48] sm:$0xf]
    %v305 = vld [vmem:[%s4 + $0x4c] sm:$0xf]
    %v306 = vld [vmem:[%s4 + $0x50] sm:$0xf]
    %v307 = vld [vmem:[%s4 + $0x54] sm:$0xf]
    %v308 = vld [vmem:[%s4 + $0x58] sm:$0xf]
    %v309 = vld [vmem:[%s4 + $0x5c] sm:$0xf]
    %v310 = vld [vmem:[%s4 + $0x60] sm:$0xf]
    %v311 = vld [vmem:[%s4 + $0x64] sm:$0xf]
    %v312 = vld [vmem:[%s4 + $0x68] sm:$0xf]
    %v313 = vld [vmem:[%s4 + $0x6c] sm:$0xf]
    %v314 = vld [vmem:[%s4 + $0x70] sm:$0xf]
    %v315 = vld [vmem:[%s4 + $0x74] sm:$0xf]
    %v316 = vld [vmem:[%s4 + $0x78] sm:$0xf]
    %v317 = vld [vmem:[%s4 + $0x7c] sm:$0xf]
    %v318 = vld [vmem:[#allocation7] sm:$0x1]
    %v320 = vlaneseq
    %v321 = vshrl.u32 %v320, 7
    %v322 = vsub.s32 0, %v321
    %v323 = vrot.slane %v318, %v322
    %v357 = vunpack.c.l.b16 %v286
    %v358 = vunpack.c.l.b16 %v287
    %v359 = vunpack.c.l.b16 %v288
    %v360 = vunpack.c.l.b16 %v289
    %v361 = vunpack.c.l.b16 %v290
    %v362 = vunpack.c.l.b16 %v291
    %v363 = vunpack.c.l.b16 %v292
    %v364 = vunpack.c.l.b16 %v293
    %v365 = vunpack.c.l.b16 %v294
    %v366 = vunpack.c.l.b16 %v295
    %v367 = vunpack.c.l.b16 %v296
    %v368 = vunpack.c.l.b16 %v297
    %v369 = vunpack.c.l.b16 %v298
    %v370 = vunpack.c.l.b16 %v299
    %v371 = vunpack.c.l.b16 %v300
    %v372 = vunpack.c.l.b16 %v301
    %v373 = vunpack.c.l.b16 %v302
    %v374 = vunpack.c.l.b16 %v303
    %v375 = vunpack.c.l.b16 %v304
    %v376 = vunpack.c.l.b16 %v305
    %v377 = vunpack.c.l.b16 %v306
    %v378 = vunpack.c.l.b16 %v307
    %v379 = vunpack.c.l.b16 %v308
    %v380 = vunpack.c.l.b16 %v309
    %v381 = vunpack.c.l.b16 %v310
    %v382 = vunpack.c.l.b16 %v311
    %v383 = vunpack.c.l.b16 %v312
    %v384 = vunpack.c.l.b16 %v313
    %v385 = vunpack.c.l.b16 %v314
    %v386 = vunpack.c.l.b16 %v315
    %v387 = vunpack.c.l.b16 %v316
    %v388 = vunpack.c.l.b16 %v317
    %v389 = vpack.c.b16 %v358, %v357
    %v390 = vpack.c.b16 %v360, %v359
    %v391 = vpack.c.b16 %v362, %v361
    %v392 = vpack.c.b16 %v364, %v363
    %v393 = vpack.c.b16 %v366, %v365
    %v394 = vpack.c.b16 %v368, %v367
    %v395 = vpack.c.b16 %v370, %v369
    %v396 = vpack.c.b16 %v372, %v371
    %v397 = vpack.c.b16 %v374, %v373
    %v398 = vpack.c.b16 %v376, %v375
    %v399 = vpack.c.b16 %v378, %v377
    %v400 = vpack.c.b16 %v380, %v379
    %v401 = vpack.c.b16 %v382, %v381
    %v402 = vpack.c.b16 %v384, %v383
    %v403 = vpack.c.b16 %v386, %v385
    %v404 = vpack.c.b16 %v388, %v387
    %421 = vmatprep.subr.bf16.mxu0 0
    %422 = vmatpush1.bf16.msra.mxu0 %v389
    %423 = vmatprep.subr.bf16.mxu0 0
    %424 = vmatpush1.bf16.msra.mxu0 %v390
    %425 = vmatprep.subr.bf16.mxu0 0
    %426 = vmatpush1.bf16.msra.mxu0 %v391
    %427 = vmatprep.subr.bf16.mxu0 0
    %428 = vmatpush1.bf16.msra.mxu0 %v392
    %429 = vmatprep.subr.bf16.mxu0 0
    %430 = vmatpush1.bf16.msra.mxu0 %v393
    %431 = vmatprep.subr.bf16.mxu0 0
    %432 = vmatpush1.bf16.msra.mxu0 %v394
    %433 = vmatprep.subr.bf16.mxu0 0
    %434 = vmatpush1.bf16.msra.mxu0 %v395
    %435 = vmatprep.subr.bf16.mxu0 0
    %436 = vmatpush1.bf16.msra.mxu0 %v396
    %437 = vmatprep.subr.bf16.mxu0 0
    %438 = vmatpush1.bf16.msra.mxu0 %v397
    %439 = vmatprep.subr.bf16.mxu0 0
    %440 = vmatpush1.bf16.msra.mxu0 %v398
    %441 = vmatprep.subr.bf16.mxu0 0
    %442 = vmatpush1.bf16.msra.mxu0 %v399
    %443 = vmatprep.subr.bf16.mxu0 0
    %444 = vmatpush1.bf16.msra.mxu0 %v400
    %445 = vmatprep.subr.bf16.mxu0 0
    %446 = vmatpush1.bf16.msra.mxu0 %v401
    %447 = vmatprep.subr.bf16.mxu0 0
    %448 = vmatpush1.bf16.msra.mxu0 %v402
    %449 = vmatprep.subr.bf16.mxu0 0
    %450 = vmatpush1.bf16.msra.mxu0 %v403
    %451 = vmatprep.subr.bf16.mxu0 0
    %452 = vmatpush1.bf16.msra.mxu0 %v404
    %453 = vmatprep.mubr.bf16.mxu0 %v285
    %454 = vmatmul.mubr.bf16.gmra.mrb[0].mxu0 %v284
    %v455 = vpop.f32.mrb[0].mxu0
    %v456 = vadd.f32 %v323, %v455
    %v457 = vpop.f32.mrb[0].mxu0
    %v458 = vpop.f32.mrb[0].mxu0
    %v459 = vpop.f32.mrb[0].mxu0
    %460 = vdwg.mxu0
    %v461 = vtanh.pop %v456
    %v462 = vpack.c.bf16 %v461, %v461
    %v463 = vld [vmem:[%s6] sm:$0xf]
    %v464 = vld [vmem:[%s6 + $0x4] sm:$0xf]
    %v465 = vld [vmem:[%s6 + $0x8] sm:$0xf]
    %v466 = vld [vmem:[%s6 + $0xc] sm:$0xf]
    %v467 = vld [vmem:[%s6 + $0x10] sm:$0xf]
    %v468 = vld [vmem:[%s6 + $0x14] sm:$0xf]
    %v469 = vld [vmem:[%s6 + $0x18] sm:$0xf]
    %v470 = vld [vmem:[%s6 + $0x1c] sm:$0xf]
    %v471 = vld [vmem:[%s6 + $0x20] sm:$0xf]
    %v472 = vld [vmem:[%s6 + $0x24] sm:$0xf]
    %v473 = vld [vmem:[%s6 + $0x28] sm:$0xf]
    %v474 = vld [vmem:[%s6 + $0x2c] sm:$0xf]
    %v475 = vld [vmem:[%s6 + $0x30] sm:$0xf]
    %v476 = vld [vmem:[%s6 + $0x34] sm:$0xf]
    %v477 = vld [vmem:[%s6 + $0x38] sm:$0xf]
    %v478 = vld [vmem:[%s6 + $0x3c] sm:$0xf]
    %v479 = vld [vmem:[#allocation8] sm:$0x1]
    %v481 = vlaneseq
    %v482 = vshrl.u32 %v481, 7
    %v483 = vsub.s32 0, %v482
    %v484 = vrot.slane %v479, %v483
    %v502 = vunpack.c.l.b16 %v463
    %v503 = vunpack.c.l.b16 %v464
    %v504 = vunpack.c.l.b16 %v465
    %v505 = vunpack.c.l.b16 %v466
    %v506 = vunpack.c.l.b16 %v467
    %v507 = vunpack.c.l.b16 %v468
    %v508 = vunpack.c.l.b16 %v469
    %v509 = vunpack.c.l.b16 %v470
    %v510 = vunpack.c.l.b16 %v471
    %v511 = vunpack.c.l.b16 %v472
    %v512 = vunpack.c.l.b16 %v473
    %v513 = vunpack.c.l.b16 %v474
    %v514 = vunpack.c.l.b16 %v475
    %v515 = vunpack.c.l.b16 %v476
    %v516 = vunpack.c.l.b16 %v477
    %v517 = vunpack.c.l.b16 %v478
    %v518 = vpack.c.b16 %v503, %v502
    %v519 = vpack.c.b16 %v505, %v504
    %v520 = vpack.c.b16 %v507, %v506
    %v521 = vpack.c.b16 %v509, %v508
    %v522 = vpack.c.b16 %v511, %v510
    %v523 = vpack.c.b16 %v513, %v512
    %v524 = vpack.c.b16 %v515, %v514
    %v525 = vpack.c.b16 %v517, %v516
    %534 = vmatprep.subr.bf16.mxu0 0
    %535 = vmatpush1.bf16.msra.mxu0 %v518
    %536 = vmatprep.subr.bf16.mxu0 0
    %537 = vmatpush1.bf16.msra.mxu0 %v519
    %538 = vmatprep.subr.bf16.mxu0 0
    %539 = vmatpush1.bf16.msra.mxu0 %v520
    %540 = vmatprep.subr.bf16.mxu0 0
    %541 = vmatpush1.bf16.msra.mxu0 %v521
    %542 = vmatprep.subr.bf16.mxu0 0
    %543 = vmatpush1.bf16.msra.mxu0 %v522
    %544 = vmatprep.subr.bf16.mxu0 0
    %545 = vmatpush1.bf16.msra.mxu0 %v523
    %546 = vmatprep.subr.bf16.mxu0 0
    %547 = vmatpush1.bf16.msra.mxu0 %v524
    %548 = vmatprep.subr.bf16.mxu0 0
    %549 = vmatpush1.bf16.msra.mxu0 %v525
    %550 = vmatprep.subr.bf16.mxu0 0
    %551 = vmatpush1.bf16.msra.mxu0 0
    %552 = vmatprep.subr.bf16.mxu0 0
    %553 = vmatpush1.bf16.msra.mxu0 0
    %554 = vmatprep.subr.bf16.mxu0 0
    %555 = vmatpush1.bf16.msra.mxu0 0
    %556 = vmatprep.subr.bf16.mxu0 0
    %557 = vmatpush1.bf16.msra.mxu0 0
    %558 = vmatprep.subr.bf16.mxu0 0
    %559 = vmatpush1.bf16.msra.mxu0 0
    %560 = vmatprep.subr.bf16.mxu0 0
    %561 = vmatpush1.bf16.msra.mxu0 0
    %562 = vmatprep.subr.bf16.mxu0 0
    %563 = vmatpush1.bf16.msra.mxu0 0
    %564 = vmatprep.subr.bf16.mxu0 0
    %565 = vmatpush1.bf16.msra.mxu0 0
    %566 = vmatprep.mubr.bf16.mxu0 0
    %567 = vmatmul.mubr.bf16.gmra.mrb[0].mxu0 %v462
    %v568 = vpop.f32.mrb[0].mxu0
    %v569 = vadd.f32 %v484, %v568
    %v570 = vpop.f32.mrb[0].mxu0
    %v571 = vpop.f32.mrb[0].mxu0
    %v572 = vpop.f32.mrb[0].mxu0
    %573 = vdwg.mxu0
    %v574 = vtanh.pop %v569
    %v575 = vpack.c.bf16 %v574, %v574
    %v576 = vld [vmem:[#allocation10] sm:$0xf]
    %v577 = vld [vmem:[#allocation10 + $0x4] sm:$0xf]
    %v578 = vld [vmem:[#allocation10 + $0x8] sm:$0xf]
    %v579 = vld [vmem:[#allocation10 + $0xc] sm:$0xf]
    %v580 = vld [vmem:[#allocation10 + $0x10] sm:$0xf]
    %v581 = vld [vmem:[#allocation10 + $0x14] sm:$0xf]
    %v582 = vld [vmem:[#allocation10 + $0x18] sm:$0xf]
    %v583 = vld [vmem:[#allocation10 + $0x1c] sm:$0xf]
    %v584 = vld [vmem:[#allocation11] sm:$0x1]
    %v586 = vlaneseq
    %v587 = vshrl.u32 %v586, 7
    %v588 = vsub.s32 0, %v587
    %v589 = vrot.slane %v584, %v588
    %v599 = vunpack.c.l.b16 %v576
    %v600 = vunpack.c.l.b16 %v577
    %v601 = vunpack.c.l.b16 %v578
    %v602 = vunpack.c.l.b16 %v579
    %v603 = vunpack.c.l.b16 %v580
    %v604 = vunpack.c.l.b16 %v581
    %v605 = vunpack.c.l.b16 %v582
    %v606 = vunpack.c.l.b16 %v583
    %v607 = vpack.c.b16 %v600, %v599
    %v608 = vpack.c.b16 %v602, %v601
    %v609 = vpack.c.b16 %v604, %v603
    %v610 = vpack.c.b16 %v606, %v605
    %v616 = vsel %vm237, %v575, 0
    %618 = vmatprep.subr.bf16.mxu0 0
    %619 = vmatpush1.bf16.msra.mxu0 %v607
    %620 = vmatprep.subr.bf16.mxu0 0
    %621 = vmatpush1.bf16.msra.mxu0 %v608
    %622 = vmatprep.subr.bf16.mxu0 0
    %623 = vmatpush1.bf16.msra.mxu0 %v609
    %624 = vmatprep.subr.bf16.mxu0 0
    %625 = vmatpush1.bf16.msra.mxu0 %v610
    %626 = vmatprep.subr.bf16.mxu0 0
    %627 = vmatpush1.bf16.msra.mxu0 0
    %628 = vmatprep.subr.bf16.mxu0 0
    %629 = vmatpush1.bf16.msra.mxu0 0
    %630 = vmatprep.subr.bf16.mxu0 0
    %631 = vmatpush1.bf16.msra.mxu0 0
    %632 = vmatprep.subr.bf16.mxu0 0
    %633 = vmatpush1.bf16.msra.mxu0 0
    %634 = vmatprep.subr.bf16.mxu0 0
    %635 = vmatpush1.bf16.msra.mxu0 0
    %636 = vmatprep.subr.bf16.mxu0 0
    %637 = vmatpush1.bf16.msra.mxu0 0
    %638 = vmatprep.subr.bf16.mxu0 0
    %639 = vmatpush1.bf16.msra.mxu0 0
    %640 = vmatprep.subr.bf16.mxu0 0
    %641 = vmatpush1.bf16.msra.mxu0 0
    %642 = vmatprep.subr.bf16.mxu0 0
    %643 = vmatpush1.bf16.msra.mxu0 0
    %644 = vmatprep.subr.bf16.mxu0 0
    %645 = vmatpush1.bf16.msra.mxu0 0
    %646 = vmatprep.subr.bf16.mxu0 0
    %647 = vmatpush1.bf16.msra.mxu0 0
    %648 = vmatprep.subr.bf16.mxu0 0
    %649 = vmatpush1.bf16.msra.mxu0 0
    %650 = vmatprep.mubr.bf16.mxu0 0
    %651 = vmatmul.mubr.bf16.gmra.mrb[0].mxu0 %v616
    %v652 = vpop.f32.mrb[0].mxu0
    %v653 = vadd.f32 %v589, %v652
    %v654 = vpop.f32.mrb[0].mxu0
    %v655 = vpop.f32.mrb[0].mxu0
    %v656 = vpop.f32.mrb[0].mxu0
    %657 = vdwg.mxu0
    %658 = vst [vmem:[#allocation18] sm:$0xff] %v653
    %659 = vrot.lane.b32.xlu0 %v653, 64
    %v660 = vpop.permute.xlu0 %659
    %v661 = vlaneseq
    %v662 = vand.u32 %v661, 127
    %vm663 = vcmp.lt.s32.totalorder %v662, 64
    %v664 = vsel %vm663, %v660, 0.0
    %v665 = vmul.f32 %v664, 0.5
    %v666 = vmul.f32 %v665, 1.442695
    %v667 = vpow.pop %v666
    %v668 = vld [vmem:[#allocation5] sm:$0xff]
    %v669 = vmul.f32 %v668, %v667
    %v670 = vadd.f32 %v653, %v669
    %v671 = vpack.c.bf16 %v670, %v670
    %v672 = vld [vmem:[%s10] sm:$0xf]
    %v673 = vld [vmem:[%s10 + $0x4] sm:$0xf]
    %v674 = vld [vmem:[%s10 + $0x8] sm:$0xf]
    %v675 = vld [vmem:[%s10 + $0xc] sm:$0xf]
    %v676 = vld [vmem:[%s10 + $0x10] sm:$0xf]
    %v677 = vld [vmem:[%s10 + $0x14] sm:$0xf]
    %v678 = vld [vmem:[%s10 + $0x18] sm:$0xf]
    %v679 = vld [vmem:[%s10 + $0x1c] sm:$0xf]
    %v680 = vld [vmem:[%s10 + $0x20] sm:$0xf]
    %v681 = vld [vmem:[%s10 + $0x24] sm:$0xf]
    %v682 = vld [vmem:[%s10 + $0x28] sm:$0xf]
    %v683 = vld [vmem:[%s10 + $0x2c] sm:$0xf]
    %v684 = vld [vmem:[%s10 + $0x30] sm:$0xf]
    %v685 = vld [vmem:[%s10 + $0x34] sm:$0xf]
    %v686 = vld [vmem:[%s10 + $0x38] sm:$0xf]
    %v687 = vld [vmem:[%s10 + $0x3c] sm:$0xf]
    %v688 = vld [vmem:[%s11] sm:$0x1]
    %v690 = vlaneseq
    %v691 = vshrl.u32 %v690, 7
    %v692 = vsub.s32 0, %v691
    %v693 = vrot.slane %v688, %v692
    %v711 = vunpack.c.l.b16 %v672
    %v712 = vunpack.c.l.b16 %v673
    %v713 = vunpack.c.l.b16 %v674
    %v714 = vunpack.c.l.b16 %v675
    %v715 = vunpack.c.l.b16 %v676
    %v716 = vunpack.c.l.b16 %v677
    %v717 = vunpack.c.l.b16 %v678
    %v718 = vunpack.c.l.b16 %v679
    %v719 = vunpack.c.l.b16 %v680
    %v720 = vunpack.c.l.b16 %v681
    %v721 = vunpack.c.l.b16 %v682
    %v722 = vunpack.c.l.b16 %v683
    %v723 = vunpack.c.l.b16 %v684
    %v724 = vunpack.c.l.b16 %v685
    %v725 = vunpack.c.l.b16 %v686
    %v726 = vunpack.c.l.b16 %v687
    %v727 = vpack.c.b16 %v712, %v711
    %v728 = vpack.c.b16 %v714, %v713
    %v729 = vpack.c.b16 %v716, %v715
    %v730 = vpack.c.b16 %v718, %v717
    %v731 = vpack.c.b16 %v720, %v719
    %v732 = vpack.c.b16 %v722, %v721
    %v733 = vpack.c.b16 %v724, %v723
    %v734 = vpack.c.b16 %v726, %v725
    %743 = vmatprep.subr.bf16.mxu0 0
    %744 = vmatpush1.bf16.msra.mxu0 %v727
    %745 = vmatprep.subr.bf16.mxu0 0
    %746 = vmatpush1.bf16.msra.mxu0 %v728
    %747 = vmatprep.subr.bf16.mxu0 0
    %748 = vmatpush1.bf16.msra.mxu0 %v729
    %749 = vmatprep.subr.bf16.mxu0 0
    %750 = vmatpush1.bf16.msra.mxu0 %v730
    %751 = vmatprep.subr.bf16.mxu0 0
    %752 = vmatpush1.bf16.msra.mxu0 %v731
    %753 = vmatprep.subr.bf16.mxu0 0
    %754 = vmatpush1.bf16.msra.mxu0 %v732
    %755 = vmatprep.subr.bf16.mxu0 0
    %756 = vmatpush1.bf16.msra.mxu0 %v733
    %757 = vmatprep.subr.bf16.mxu0 0
    %758 = vmatpush1.bf16.msra.mxu0 %v734
    %759 = vmatprep.subr.bf16.mxu0 0
    %760 = vmatpush1.bf16.msra.mxu0 0
    %761 = vmatprep.subr.bf16.mxu0 0
    %762 = vmatpush1.bf16.msra.mxu0 0
    %763 = vmatprep.subr.bf16.mxu0 0
    %764 = vmatpush1.bf16.msra.mxu0 0
    %765 = vmatprep.subr.bf16.mxu0 0
    %766 = vmatpush1.bf16.msra.mxu0 0
    %767 = vmatprep.subr.bf16.mxu0 0
    %768 = vmatpush1.bf16.msra.mxu0 0
    %769 = vmatprep.subr.bf16.mxu0 0
    %770 = vmatpush1.bf16.msra.mxu0 0
    %771 = vmatprep.subr.bf16.mxu0 0
    %772 = vmatpush1.bf16.msra.mxu0 0
    %773 = vmatprep.subr.bf16.mxu0 0
    %774 = vmatpush1.bf16.msra.mxu0 0
    %775 = vmatprep.mubr.bf16.mxu0 0
    %776 = vmatmul.mubr.bf16.gmra.mrb[0].mxu0 %v671
    %v777 = vpop.f32.mrb[0].mxu0
    %v778 = vadd.f32 %v693, %v777
    %v779 = vpop.f32.mrb[0].mxu0
    %v780 = vpop.f32.mrb[0].mxu0
    %v781 = vpop.f32.mrb[0].mxu0
    %782 = vdwg.mxu0
    %v783 = vtanh.pop %v778
    %v784 = vpack.c.bf16 %v783, %v783
    %v785 = vld [vmem:[#allocation13] sm:$0xf]
    %v786 = vld [vmem:[#allocation13 + $0x4] sm:$0xf]
    %v787 = vld [vmem:[#allocation13 + $0x8] sm:$0xf]
    %v788 = vld [vmem:[#allocation13 + $0xc] sm:$0xf]
    %v789 = vld [vmem:[#allocation13 + $0x10] sm:$0xf]
    %v790 = vld [vmem:[#allocation13 + $0x14] sm:$0xf]
    %v791 = vld [vmem:[#allocation13 + $0x18] sm:$0xf]
    %v792 = vld [vmem:[#allocation13 + $0x1c] sm:$0xf]
    %v793 = vld [vmem:[%s13] sm:$0x1]
    %v795 = vlaneseq
    %v796 = vshrl.u32 %v795, 7
    %v797 = vsub.s32 0, %v796
    %v798 = vrot.slane %v793, %v797
    %v808 = vunpack.c.l.b16 %v785
    %v809 = vunpack.c.l.b16 %v786
    %v810 = vunpack.c.l.b16 %v787
    %v811 = vunpack.c.l.b16 %v788
    %v812 = vunpack.c.l.b16 %v789
    %v813 = vunpack.c.l.b16 %v790
    %v814 = vunpack.c.l.b16 %v791
    %v815 = vunpack.c.l.b16 %v792
    %v816 = vpack.c.b16 %v809, %v808
    %v817 = vpack.c.b16 %v811, %v810
    %v818 = vpack.c.b16 %v813, %v812
    %v819 = vpack.c.b16 %v815, %v814
    %v825 = vsel %vm237, %v784, 0
    %827 = vmatprep.subr.bf16.mxu0 0
    %828 = vmatpush1.bf16.msra.mxu0 %v816
    %829 = vmatprep.subr.bf16.mxu0 0
    %830 = vmatpush1.bf16.msra.mxu0 %v817
    %831 = vmatprep.subr.bf16.mxu0 0
    %832 = vmatpush1.bf16.msra.mxu0 %v818
    %833 = vmatprep.subr.bf16.mxu0 0
    %834 = vmatpush1.bf16.msra.mxu0 %v819
    %835 = vmatprep.subr.bf16.mxu0 0
    %836 = vmatpush1.bf16.msra.mxu0 0
    %837 = vmatprep.subr.bf16.mxu0 0
    %838 = vmatpush1.bf16.msra.mxu0 0
    %839 = vmatprep.subr.bf16.mxu0 0
    %840 = vmatpush1.bf16.msra.mxu0 0
    %841 = vmatprep.subr.bf16.mxu0 0
    %842 = vmatpush1.bf16.msra.mxu0 0
    %843 = vmatprep.subr.bf16.mxu0 0
    %844 = vmatpush1.bf16.msra.mxu0 0
    %845 = vmatprep.subr.bf16.mxu0 0
    %846 = vmatpush1.bf16.msra.mxu0 0
    %847 = vmatprep.subr.bf16.mxu0 0
    %848 = vmatpush1.bf16.msra.mxu0 0
    %849 = vmatprep.subr.bf16.mxu0 0
    %850 = vmatpush1.bf16.msra.mxu0 0
    %851 = vmatprep.subr.bf16.mxu0 0
    %852 = vmatpush1.bf16.msra.mxu0 0
    %853 = vmatprep.subr.bf16.mxu0 0
    %854 = vmatpush1.bf16.msra.mxu0 0
    %855 = vmatprep.subr.bf16.mxu0 0
    %856 = vmatpush1.bf16.msra.mxu0 0
    %857 = vmatprep.subr.bf16.mxu0 0
    %858 = vmatpush1.bf16.msra.mxu0 0
    %859 = vmatprep.mubr.bf16.mxu0 0
    %860 = vmatmul.mubr.bf16.gmra.mrb[0].mxu0 %v825
    %v861 = vpop.f32.mrb[0].mxu0
    %v862 = vadd.f32 %v798, %v861
    %v863 = vpop.f32.mrb[0].mxu0
    %v864 = vpop.f32.mrb[0].mxu0
    %v865 = vpop.f32.mrb[0].mxu0
    %866 = vdwg.mxu0
    %v867 = vtanh.pop %v862
    %v868 = vpack.c.bf16 %v867, %v867
    %v869 = vld [vmem:[#allocation14] sm:$0xff]
    %v870 = vld [vmem:[#allocation14 + $0x8] sm:$0xff]
    %v871 = vld [vmem:[#allocation14 + $0x10] sm:$0xff]
    %v872 = vld [vmem:[#allocation14 + $0x18] sm:$0xff]
    %v873 = vld [vmem:[#allocation14 + $0x20] sm:$0xff]
    %v874 = vld [vmem:[#allocation14 + $0x28] sm:$0xff]
    %v875 = vld [vmem:[#allocation14 + $0x30] sm:$0xff]
    %v876 = vld [vmem:[#allocation14 + $0x38] sm:$0xff]
    %v877 = vld [vmem:[#allocation14 + $0x40] sm:$0xff]
    %v878 = vld [vmem:[#allocation14 + $0x48] sm:$0xff]
    %v879 = vld [vmem:[#allocation14 + $0x50] sm:$0xff]
    %v880 = vld [vmem:[#allocation14 + $0x58] sm:$0xff]
    %v881 = vld [vmem:[#allocation14 + $0x60] sm:$0xff]
    %v882 = vld [vmem:[#allocation14 + $0x68] sm:$0xff]
    %v883 = vld [vmem:[#allocation14 + $0x70] sm:$0xff]
    %v884 = vld [vmem:[#allocation14 + $0x78] sm:$0xff]
    %v885 = vld [vmem:[%s15] sm:$0x3]
    %v887 = vlaneseq
    %v888 = vshrl.u32 %v887, 7
    %v889 = vsub.s32 0, %v888
    %v890 = vrot.slane %v885, %v889
    %v891 = vlaneseq
    %v892 = vshrl.u32 %v891, 7
    %v893 = vsub.s32 1, %v892
    %v894 = vrot.slane %v885, %v893
    %v913 = vunpack.c.l.b16 %v869
    %v914 = vunpack.c.h.b16 %v869
    %v915 = vunpack.c.l.b16 %v870
    %v916 = vunpack.c.h.b16 %v870
    %v917 = vunpack.c.l.b16 %v871
    %v918 = vunpack.c.h.b16 %v871
    %v919 = vunpack.c.l.b16 %v872
    %v920 = vunpack.c.h.b16 %v872
    %v921 = vunpack.c.l.b16 %v873
    %v922 = vunpack.c.h.b16 %v873
    %v923 = vunpack.c.l.b16 %v874
    %v924 = vunpack.c.h.b16 %v874
    %v925 = vunpack.c.l.b16 %v875
    %v926 = vunpack.c.h.b16 %v875
    %v927 = vunpack.c.l.b16 %v876
    %v928 = vunpack.c.h.b16 %v876
    %v929 = vunpack.c.l.b16 %v877
    %v930 = vunpack.c.h.b16 %v877
    %v931 = vunpack.c.l.b16 %v878
    %v932 = vunpack.c.h.b16 %v878
    %v933 = vunpack.c.l.b16 %v879
    %v934 = vunpack.c.h.b16 %v879
    %v935 = vunpack.c.l.b16 %v880
    %v936 = vunpack.c.h.b16 %v880
    %v937 = vunpack.c.l.b16 %v881
    %v938 = vunpack.c.h.b16 %v881
    %v939 = vunpack.c.l.b16 %v882
    %v940 = vunpack.c.h.b16 %v882
    %v941 = vunpack.c.l.b16 %v883
    %v942 = vunpack.c.h.b16 %v883
    %v943 = vunpack.c.l.b16 %v884
    %v944 = vunpack.c.h.b16 %v884
    %v945 = vpack.c.b16 %v915, %v913
    %v946 = vpack.c.b16 %v916, %v914
    %v947 = vpack.c.b16 %v919, %v917
    %v948 = vpack.c.b16 %v920, %v918
    %v949 = vpack.c.b16 %v923, %v921
    %v950 = vpack.c.b16 %v924, %v922
    %v951 = vpack.c.b16 %v927, %v925
    %v952 = vpack.c.b16 %v928, %v926
    %v953 = vpack.c.b16 %v931, %v929
    %v954 = vpack.c.b16 %v932, %v930
    %v955 = vpack.c.b16 %v935, %v933
    %v956 = vpack.c.b16 %v936, %v934
    %v957 = vpack.c.b16 %v939, %v937
    %v958 = vpack.c.b16 %v940, %v938
    %v959 = vpack.c.b16 %v943, %v941
    %v960 = vpack.c.b16 %v944, %v942
    %977 = vmatprep.subr.bf16.mxu0 %v946
    %978 = vmatpush1.bf16.msra.mxu0 %v945
    %979 = vmatprep.subr.bf16.mxu0 %v948
    %980 = vmatpush1.bf16.msra.mxu0 %v947
    %981 = vmatprep.subr.bf16.mxu0 %v950
    %982 = vmatpush1.bf16.msra.mxu0 %v949
    %983 = vmatprep.subr.bf16.mxu0 %v952
    %984 = vmatpush1.bf16.msra.mxu0 %v951
    %985 = vmatprep.subr.bf16.mxu0 %v954
    %986 = vmatpush1.bf16.msra.mxu0 %v953
    %987 = vmatprep.subr.bf16.mxu0 %v956
    %988 = vmatpush1.bf16.msra.mxu0 %v955
    %989 = vmatprep.subr.bf16.mxu0 %v958
    %990 = vmatpush1.bf16.msra.mxu0 %v957
    %991 = vmatprep.subr.bf16.mxu0 %v960
    %992 = vmatpush1.bf16.msra.mxu0 %v959
    %993 = vmatprep.subr.bf16.mxu0 0
    %994 = vmatpush1.bf16.msra.mxu0 0
    %995 = vmatprep.subr.bf16.mxu0 0
    %996 = vmatpush1.bf16.msra.mxu0 0
    %997 = vmatprep.subr.bf16.mxu0 0
    %998 = vmatpush1.bf16.msra.mxu0 0
    %999 = vmatprep.subr.bf16.mxu0 0
    %1000 = vmatpush1.bf16.msra.mxu0 0
    %1001 = vmatprep.subr.bf16.mxu0 0
    %1002 = vmatpush1.bf16.msra.mxu0 0
    %1003 = vmatprep.subr.bf16.mxu0 0
    %1004 = vmatpush1.bf16.msra.mxu0 0
    %1005 = vmatprep.subr.bf16.mxu0 0
    %1006 = vmatpush1.bf16.msra.mxu0 0
    %1007 = vmatprep.subr.bf16.mxu0 0
    %1008 = vmatpush1.bf16.msra.mxu0 0
    %1009 = vmatprep.mubr.bf16.mxu0 0
    %1010 = vmatmul.mubr.bf16.gmra.mrb[0].mxu0 %v868
    %v1011 = vpop.f32.mrb[0].mxu0
    %v1012 = vadd.f32 %v890, %v1011
    %v1013 = vpop.f32.mrb[0].mxu0
    %v1014 = vadd.f32 %v894, %v1013
    %v1015 = vpop.f32.mrb[0].mxu0
    %v1016 = vpop.f32.mrb[0].mxu0
    %1017 = vdwg.mxu0
    %v1018 = vtanh.pop %v1012
    %v1019 = vtanh.pop %v1014
    %v1020 = vpack.c.bf16 %v1018, %v1018
    %v1021 = vpack.c.bf16 %v1019, %v1019
    %v1022 = vld [vmem:[#allocation16] sm:$0xf]
    %v1023 = vld [vmem:[#allocation16 + $0x4] sm:$0xf]
    %v1024 = vld [vmem:[#allocation16 + $0x8] sm:$0xf]
    %v1025 = vld [vmem:[#allocation16 + $0xc] sm:$0xf]
    %v1026 = vld [vmem:[#allocation16 + $0x10] sm:$0xf]
    %v1027 = vld [vmem:[#allocation16 + $0x14] sm:$0xf]
    %v1028 = vld [vmem:[#allocation16 + $0x18] sm:$0xf]
    %v1029 = vld [vmem:[#allocation16 + $0x1c] sm:$0xf]
    %v1030 = vld [vmem:[#allocation16 + $0x20] sm:$0xf]
    %v1031 = vld [vmem:[#allocation16 + $0x24] sm:$0xf]
    %v1032 = vld [vmem:[#allocation16 + $0x28] sm:$0xf]
    %v1033 = vld [vmem:[#allocation16 + $0x2c] sm:$0xf]
    %v1034 = vld [vmem:[#allocation16 + $0x30] sm:$0xf]
    %v1035 = vld [vmem:[#allocation16 + $0x34] sm:$0xf]
    %v1036 = vld [vmem:[#allocation16 + $0x38] sm:$0xf]
    %v1037 = vld [vmem:[#allocation16 + $0x3c] sm:$0xf]
    %v1038 = vld [vmem:[#allocation16 + $0x40] sm:$0xf]
    %v1039 = vld [vmem:[#allocation16 + $0x44] sm:$0xf]
    %v1040 = vld [vmem:[#allocation16 + $0x48] sm:$0xf]
    %v1041 = vld [vmem:[#allocation16 + $0x4c] sm:$0xf]
    %v1042 = vld [vmem:[#allocation16 + $0x50] sm:$0xf]
    %v1043 = vld [vmem:[#allocation16 + $0x54] sm:$0xf]
    %v1044 = vld [vmem:[#allocation16 + $0x58] sm:$0xf]
    %v1045 = vld [vmem:[#allocation16 + $0x5c] sm:$0xf]
    %v1046 = vld [vmem:[#allocation16 + $0x60] sm:$0xf]
    %v1047 = vld [vmem:[#allocation16 + $0x64] sm:$0xf]
    %v1048 = vld [vmem:[#allocation16 + $0x68] sm:$0xf]
    %v1049 = vld [vmem:[#allocation16 + $0x6c] sm:$0xf]
    %v1050 = vld [vmem:[#allocation16 + $0x70] sm:$0xf]
    %v1051 = vld [vmem:[#allocation16 + $0x74] sm:$0xf]
    %v1052 = vld [vmem:[#allocation16 + $0x78] sm:$0xf]
    %v1053 = vld [vmem:[#allocation16 + $0x7c] sm:$0xf]
    %v1054 = vld [vmem:[%s17] sm:$0x1]
    %v1056 = vlaneseq
    %v1057 = vshrl.u32 %v1056, 7
    %v1058 = vsub.s32 0, %v1057
    %v1059 = vrot.slane %v1054, %v1058
    %v1093 = vunpack.c.l.b16 %v1022
    %v1094 = vunpack.c.l.b16 %v1023
    %v1095 = vunpack.c.l.b16 %v1024
    %v1096 = vunpack.c.l.b16 %v1025
    %v1097 = vunpack.c.l.b16 %v1026
    %v1098 = vunpack.c.l.b16 %v1027
    %v1099 = vunpack.c.l.b16 %v1028
    %v1100 = vunpack.c.l.b16 %v1029
    %v1101 = vunpack.c.l.b16 %v1030
    %v1102 = vunpack.c.l.b16 %v1031
    %v1103 = vunpack.c.l.b16 %v1032
    %v1104 = vunpack.c.l.b16 %v1033
    %v1105 = vunpack.c.l.b16 %v1034
    %v1106 = vunpack.c.l.b16 %v1035
    %v1107 = vunpack.c.l.b16 %v1036
    %v1108 = vunpack.c.l.b16 %v1037
    %v1109 = vunpack.c.l.b16 %v1038
    %v1110 = vunpack.c.l.b16 %v1039
    %v1111 = vunpack.c.l.b16 %v1040
    %v1112 = vunpack.c.l.b16 %v1041
    %v1113 = vunpack.c.l.b16 %v1042
    %v1114 = vunpack.c.l.b16 %v1043
    %v1115 = vunpack.c.l.b16 %v1044
    %v1116 = vunpack.c.l.b16 %v1045
    %v1117 = vunpack.c.l.b16 %v1046
    %v1118 = vunpack.c.l.b16 %v1047
    %v1119 = vunpack.c.l.b16 %v1048
    %v1120 = vunpack.c.l.b16 %v1049
    %v1121 = vunpack.c.l.b16 %v1050
    %v1122 = vunpack.c.l.b16 %v1051
    %v1123 = vunpack.c.l.b16 %v1052
    %v1124 = vunpack.c.l.b16 %v1053
    %v1125 = vpack.c.b16 %v1094, %v1093
    %v1126 = vpack.c.b16 %v1096, %v1095
    %v1127 = vpack.c.b16 %v1098, %v1097
    %v1128 = vpack.c.b16 %v1100, %v1099
    %v1129 = vpack.c.b16 %v1102, %v1101
    %v1130 = vpack.c.b16 %v1104, %v1103
    %v1131 = vpack.c.b16 %v1106, %v1105
    %v1132 = vpack.c.b16 %v1108, %v1107
    %v1133 = vpack.c.b16 %v1110, %v1109
    %v1134 = vpack.c.b16 %v1112, %v1111
    %v1135 = vpack.c.b16 %v1114, %v1113
    %v1136 = vpack.c.b16 %v1116, %v1115
    %v1137 = vpack.c.b16 %v1118, %v1117
    %v1138 = vpack.c.b16 %v1120, %v1119
    %v1139 = vpack.c.b16 %v1122, %v1121
    %v1140 = vpack.c.b16 %v1124, %v1123
    %1157 = vmatprep.subr.bf16.mxu0 0
    %1158 = vmatpush1.bf16.msra.mxu0 %v1125
    %1159 = vmatprep.subr.bf16.mxu0 0
    %1160 = vmatpush1.bf16.msra.mxu0 %v1126
    %1161 = vmatprep.subr.bf16.mxu0 0
    %1162 = vmatpush1.bf16.msra.mxu0 %v1127
    %1163 = vmatprep.subr.bf16.mxu0 0
    %1164 = vmatpush1.bf16.msra.mxu0 %v1128
    %1165 = vmatprep.subr.bf16.mxu0 0
    %1166 = vmatpush1.bf16.msra.mxu0 %v1129
    %1167 = vmatprep.subr.bf16.mxu0 0
    %1168 = vmatpush1.bf16.msra.mxu0 %v1130
    %1169 = vmatprep.subr.bf16.mxu0 0
    %1170 = vmatpush1.bf16.msra.mxu0 %v1131
    %1171 = vmatprep.subr.bf16.mxu0 0
    %1172 = vmatpush1.bf16.msra.mxu0 %v1132
    %1173 = vmatprep.subr.bf16.mxu0 0
    %1174 = vmatpush1.bf16.msra.mxu0 %v1133
    %1175 = vmatprep.subr.bf16.mxu0 0
    %1176 = vmatpush1.bf16.msra.mxu0 %v1134
    %1177 = vmatprep.subr.bf16.mxu0 0
    %1178 = vmatpush1.bf16.msra.mxu0 %v1135
    %1179 = vmatprep.subr.bf16.mxu0 0
    %1180 = vmatpush1.bf16.msra.mxu0 %v1136
    %1181 = vmatprep.subr.bf16.mxu0 0
    %1182 = vmatpush1.bf16.msra.mxu0 %v1137
    %1183 = vmatprep.subr.bf16.mxu0 0
    %1184 = vmatpush1.bf16.msra.mxu0 %v1138
    %1185 = vmatprep.subr.bf16.mxu0 0
    %1186 = vmatpush1.bf16.msra.mxu0 %v1139
    %1187 = vmatprep.subr.bf16.mxu0 0
    %1188 = vmatpush1.bf16.msra.mxu0 %v1140
    %1189 = vmatprep.mubr.bf16.mxu0 %v1021
    %1190 = vmatmul.mubr.bf16.gmra.mrb[0].mxu0 %v1020
    %v1191 = vpop.f32.mrb[0].mxu0
    %v1192 = vadd.f32 %v1059, %v1191
    %v1193 = vpop.f32.mrb[0].mxu0
    %v1194 = vpop.f32.mrb[0].mxu0
    %v1195 = vpop.f32.mrb[0].mxu0
    %1196 = vdwg.mxu0
    %1197 = vst [vmem:[#allocation17] sm:$0xff] %v1192
    // Predicated region
    $region110: #{tpu_custom_call.1} parent=1 // pred_check
      _
    $region111: #{tpu_custom_call.1} parent=1 // pred_check_branch
      %1199 = sbr.rel (0) target = $region113
    $region112: #{tpu_custom_call.1} parent=1 // pred_region
      %s1201 = ssub.s32 128, 128
      %1202 = vsyncadd [#allocation4], %s1201
      %s1204 = sshll.u32 [#allocation17], 4
      %s1205 = int_to_ptr.vmem [resolvable:$true] %s1204
      %1207 = dma.vmem_to_hbm [thread:$0]  %s1205, 128, %s18, [#allocation4]
    $region113: #{tpu_custom_call.1} parent=1 // pred_fallthru
      _
    // Predicated region
    $region114: #{tpu_custom_call.1} parent=1 // pred_check
      _
    $region115: #{tpu_custom_call.1} parent=1 // pred_check_branch
      %1209 = sbr.rel (0) target = $region117
    $region116: #{tpu_custom_call.1} parent=1 // pred_region
      %s1211 = ssub.s32 128, 128
      %1212 = vsyncadd [#allocation19], %s1211
      %s1214 = sshll.u32 [#allocation18], 4
      %s1215 = int_to_ptr.vmem [resolvable:$true] %s1214
      %1217 = dma.vmem_to_hbm [thread:$0]  %s1215, 128, %s19, [#allocation19]
    $region117: #{tpu_custom_call.1} parent=1 // pred_fallthru
      _
    // Predicated region
    $region118: #{tpu_custom_call.1} parent=1 // pred_check
      _
    $region119: #{tpu_custom_call.1} parent=1 // pred_check_branch
      %1219 = sbr.rel (0) target = $region121
    $region120: #{tpu_custom_call.1} parent=1 // pred_region
      %1220 = dma.done [#allocation4], 128
    $region121: #{tpu_custom_call.1} parent=1 // pred_fallthru
      _
    // Predicated region
    $region122: #{tpu_custom_call.1} parent=1 // pred_check
      _
    $region123: #{tpu_custom_call.1} parent=1 // pred_check_branch
      %1222 = sbr.rel (0) target = $region125
    $region124: #{tpu_custom_call.1} parent=1 // pred_region
      %1223 = dma.done [#allocation19], 128
    $region125: #{tpu_custom_call.1} parent=1 // pred_fallthru
      _
    %1224 = vsyncpa [#allocation3], 1
    %1225 = vsyncpa [#allocation6], 1
    %1226 = vsyncpa [#allocation9], 1
    %1227 = vsyncpa [#allocation12], 1
    %1228 = vsyncpa [#allocation15], 1
    %1229 = vsyncpa [#allocation4], 1
    %1230 = vsyncpa [#allocation19], 1

</llo_original>
